<compile_context>
chip_gen: v7x
topology: tpu7x:2x2x1
jax: 0.10.0
libtpu: 0.0.40
codegen_flags: <defaults>
</compile_context>

<pallas_src>
import functools
import math

import jax
import jax.numpy as jnp
from jax import lax
from jax.experimental import pallas as pl
from jax.experimental.pallas import tpu as pltpu


# ---------------------------------------------------------------------------
# hardware-aware sizing
# ---------------------------------------------------------------------------
def _phys_vmem_bytes():
    try:
        info = pltpu.get_tpu_info()
        v = getattr(info, "vmem_capacity_bytes", None)
        if v:
            return int(v)
    except Exception:
        pass
    return 64 * 1024 * 1024          # conservative fallback (v7x-sized)


_PHYS_VMEM = _phys_vmem_bytes()
# Never request the full physical VMEM: leave headroom for compiler-internal
# scratch and double-buffering (v7x: ~51 of 64 MiB; v5e/v6e: 100 of 128 MiB).
_VMEM_LIMIT = min(int(_PHYS_VMEM * 0.8), 100 * 1024 * 1024)
_BIG_VMEM = _PHYS_VMEM >= 96 * 1024 * 1024
_MAX_TM = 512 if _BIG_VMEM else 256        # row tile for B*T-tiled kernels
_MAX_TN = 2048 if _BIG_VMEM else 1024      # lm_head vocab tile


# ---------------------------------------------------------------------------
# helpers usable both inside kernels (traced) and in the pure-JAX reference
# ---------------------------------------------------------------------------
def _layernorm(x, w, b, eps=1e-5):
    mu = jnp.mean(x, axis=-1, keepdims=True)
    var = jnp.mean((x - mu) ** 2, axis=-1, keepdims=True)
    return (x - mu) * lax.rsqrt(var + eps) * w + b


def _gelu_tanh(x):
    c = math.sqrt(2.0 / math.pi)
    return 0.5 * x * (1.0 + jnp.tanh(c * (x + 0.044715 * x * x * x)))


def _round_up(x, m):
    return ((x + m - 1) // m) * m


def _row_tiling(rows, max_tm=None):
    """Pick a row tile (multiple of 8) and padded row count."""
    max_tm = max_tm or _MAX_TM
    if rows >= max_tm:
        return max_tm, _round_up(rows, max_tm)
    tm = _round_up(rows, 8)
    return tm, tm


def _vocab_tiling(vocab_size):
    """Vocab tile width (multiple of 128) and padded vocab size."""
    tn = min(_MAX_TN, 128 * pl.cdiv(vocab_size, 128))
    vp = pl.cdiv(vocab_size, tn) * tn
    return tn, vp


def _seq_tiling(T, max_tq=256):
    """q-tile length: a divisor of T, multiple of 8 when possible."""
    if T <= max_tq:
        return T
    for tq in range(max_tq, 0, -8):
        if T % tq == 0:
            return tq
    return T


def _const_spec(shape, index_map):
    """Single-buffered BlockSpec for blocks whose index never changes
    (resident weights): halves their VMEM footprint.  Falls back to a
    default spec if the installed JAX lacks `pipeline_mode`."""
    try:
        return pl.BlockSpec(shape, index_map, pipeline_mode=pl.Buffered(1))
    except TypeError:
        return pl.BlockSpec(shape, index_map)


# ---------------------------------------------------------------------------
# Pallas kernels
# ---------------------------------------------------------------------------
def qkv_kernel(x_ref, ln1w, ln1b, w_ref, b_ref, o_ref):
    """o = LayerNorm(x) @ W_qkv + b_qkv   (row tile of B*T)."""
    x = x_ref[...].astype(jnp.float32)
    h = _layernorm(x, ln1w[...], ln1b[...])
    y = jnp.dot(h.astype(jnp.bfloat16), w_ref[...],
                preferred_element_type=jnp.float32) + b_ref[...]
    o_ref[...] = y.astype(o_ref.dtype)


def attn_kernel(q_ref, k_ref, v_ref, o_ref):
    """Flash-style causal attention for one (batch, q-tile), all heads.

    q_ref: (tq, H, hd)   k_ref / v_ref: (T, H, hd)   o_ref: (tq, H*hd)
    The 1/sqrt(hd) scale is already folded into W_qkv at init, so q is used
    as-is.  kv tiles entirely above the causal diagonal are never visited.
    """
    qi = pl.program_id(1)
    q = q_ref[...]                                        # (tq, H, hd) bf16
    tq, H, hd = q.shape
    tkv = tq
    # On-chip head-major relayouts (cheap vs. the HBM transposes they replace).
    qh = jnp.transpose(q, (1, 0, 2))                      # (H, tq, hd)

    row = qi * tq + lax.broadcasted_iota(jnp.int32, (tq, tkv), 0)

    m0 = jnp.full((H, tq, 1), -1e30, jnp.float32)
    l0 = jnp.zeros((H, tq, 1), jnp.float32)
    a0 = jnp.zeros((H, tq, hd), jnp.float32)

    def body(s_idx, carry):
        m, l, acc = carry
        start = pl.multiple_of(s_idx * tkv, tkv)
        kh = jnp.transpose(k_ref[pl.ds(start, tkv), :, :], (1, 0, 2))  # (H,tkv,hd)
        vh = jnp.transpose(v_ref[pl.ds(start, tkv), :, :], (1, 0, 2))
        s = jnp.einsum("hqd,hkd->hqk", qh, kh,
                       preferred_element_type=jnp.float32)             # (H,tq,tkv)
        col = start + lax.broadcasted_iota(jnp.int32, (tq, tkv), 1)
        s = jnp.where((row >= col)[None, :, :], s, -1e30)
        m_new = jnp.maximum(m, jnp.max(s, axis=-1, keepdims=True))
        alpha = jnp.exp(m - m_new)
        p = jnp.exp(s - m_new)
        l_new = alpha * l + jnp.sum(p, axis=-1, keepdims=True)
        acc_new = alpha * acc + jnp.einsum(
            "hqk,hkd->hqd", p.astype(jnp.bfloat16), vh,
            preferred_element_type=jnp.float32)
        return m_new, l_new, acc_new

    n_kv = qi + 1          # causal: only tiles at / below the diagonal
    _, l, acc = lax.fori_loop(0, n_kv, body, (m0, l0, a0))

    out = acc * pl.reciprocal(l, approx=True)             # EUP, not VALU divide
    out = jnp.transpose(out, (1, 0, 2)).reshape(tq, H * hd)
    o_ref[...] = out.astype(o_ref.dtype)                  # lane-dense (tq, C) store


def post_attn_kernel(x_ref, y_ref, wap, bap, ln2w, ln2b,
                     wfc, bfc, wmp, bmp, o_ref):
    """x += y @ W_proj + b ; x += MLP(LayerNorm(x))   (row tile of B*T)."""
    x = x_ref[...].astype(jnp.float32)
    y = y_ref[...]                                        # bf16
    x = x + jnp.dot(y, wap[...], preferred_element_type=jnp.float32) + bap[...]
    h = _layernorm(x, ln2w[...], ln2b[...])
    h = jnp.dot(h.astype(jnp.bfloat16), wfc[...],
                preferred_element_type=jnp.float32) + bfc[...]
    h = _gelu_tanh(h)
    x = x + jnp.dot(h.astype(jnp.bfloat16), wmp[...],
                    preferred_element_type=jnp.float32) + bmp[...]
    o_ref[...] = x.astype(o_ref.dtype)


def lm_head_kernel(x_ref, lnw, lnb, w_ref, o_ref, h_scratch):
    """Final LayerNorm (once per row tile) + tied lm_head tile.

    grid = (row_tiles, vocab_tiles); w_ref is a (TN, C) slice of the
    (V_pad, C) embedding — contraction along C, no transpose materialized.
    """
    @pl.when(pl.program_id(1) == 0)
    def _():
        x = x_ref[...].astype(jnp.float32)
        h_scratch[...] = _layernorm(x, lnw[...], lnb[...]).astype(jnp.bfloat16)

    o_ref[...] = jnp.einsum("mc,vc->mv", h_scratch[...], w_ref[...],
                            preferred_element_type=jnp.float32
                            ).astype(o_ref.dtype)


# ---------------------------------------------------------------------------
# Pallas wrappers
# ---------------------------------------------------------------------------
def run_qkv(x, p):
    R, C = x.shape
    tm, rp = _row_tiling(R)
    xp = x if rp == R else jnp.pad(x, ((0, rp - R), (0, 0)))
    out = pl.pallas_call(
        qkv_kernel,
        out_shape=jax.ShapeDtypeStruct((rp, 3 * C), jnp.bfloat16),
        grid=(rp // tm,),
        in_specs=[
            pl.BlockSpec((tm, C), lambda i: (i, 0)),
            pl.BlockSpec((1, C), lambda i: (0, 0)),
            pl.BlockSpec((1, C), lambda i: (0, 0)),
            _const_spec((C, 3 * C), lambda i: (0, 0)),
            pl.BlockSpec((1, 3 * C), lambda i: (0, 0)),
        ],
        out_specs=pl.BlockSpec((tm, 3 * C), lambda i: (i, 0)),
        compiler_params=pltpu.CompilerParams(
            dimension_semantics=("parallel",),
            vmem_limit_bytes=_VMEM_LIMIT),
    )(xp, p["ln1_w"], p["ln1_b"], p["w_qkv"], p["b_qkv"])
    return out if rp == R else out[:R]


def run_attention(qkv, B, T, H, hd):
    """qkv: (B*T, 3C) bf16 -> attention output (B*T, C) bf16.

    No XLA transposes: q/k/v are sliced straight out of the natural
    (B, T, 3, H, hd) view via BlockSpecs; the output is written into a
    (B, T, C) buffer so the final reshape is free.
    """
    C = H * hd
    qkv5 = qkv.reshape(B, T, 3, H, hd)       # free (contiguous) reshape
    tq = _seq_tiling(T)
    y = pl.pallas_call(
        attn_kernel,
        out_shape=jax.ShapeDtypeStruct((B, T, C), jnp.bfloat16),
        grid=(B, T // tq),
        in_specs=[
            pl.BlockSpec((None, tq, None, H, hd), lambda b, qi: (b, qi, 0, 0, 0)),
            pl.BlockSpec((None, T, None, H, hd), lambda b, qi: (b, 0, 1, 0, 0)),
            pl.BlockSpec((None, T, None, H, hd), lambda b, qi: (b, 0, 2, 0, 0)),
        ],
        out_specs=pl.BlockSpec((None, tq, C), lambda b, qi: (b, qi, 0)),
        compiler_params=pltpu.CompilerParams(
            dimension_semantics=("parallel", "arbitrary"),
            vmem_limit_bytes=_VMEM_LIMIT),
    )(qkv5, qkv5, qkv5)
    return y.reshape(B * T, C)


def run_post_attn(x, y, p):
    R, C = x.shape
    tm, rp = _row_tiling(R)
    if rp != R:
        x = jnp.pad(x, ((0, rp - R), (0, 0)))
        y = jnp.pad(y, ((0, rp - R), (0, 0)))
    out = pl.pallas_call(
        post_attn_kernel,
        out_shape=jax.ShapeDtypeStruct((rp, C), jnp.float32),
        grid=(rp // tm,),
        in_specs=[
            pl.BlockSpec((tm, C), lambda i: (i, 0)),        # x (residual)
            pl.BlockSpec((tm, C), lambda i: (i, 0)),        # y (attn out)
            _const_spec((C, C), lambda i: (0, 0)),          # w_ap
            pl.BlockSpec((1, C), lambda i: (0, 0)),         # b_ap
            pl.BlockSpec((1, C), lambda i: (0, 0)),         # ln2_w
            pl.BlockSpec((1, C), lambda i: (0, 0)),         # ln2_b
            _const_spec((C, 4 * C), lambda i: (0, 0)),      # w_fc
            pl.BlockSpec((1, 4 * C), lambda i: (0, 0)),     # b_fc
            _const_spec((4 * C, C), lambda i: (0, 0)),      # w_mp
            pl.BlockSpec((1, C), lambda i: (0, 0)),         # b_mp
        ],
        out_specs=pl.BlockSpec((tm, C), lambda i: (i, 0)),
        compiler_params=pltpu.CompilerParams(
            dimension_semantics=("parallel",),
            vmem_limit_bytes=_VMEM_LIMIT),
    )(x, y, p["w_ap"], p["b_ap"], p["ln2_w"], p["ln2_b"],
      p["w_fc"], p["b_fc"], p["w_mp"], p["b_mp"])
    return out if rp == R else out[:R]


def run_lm_head(x, lnw, lnb, w_head, vocab_size):
    R, C = x.shape
    Vp = w_head.shape[0]
    tn, _ = _vocab_tiling(vocab_size)
    tm, rp = _row_tiling(R)
    if rp != R:
        x = jnp.pad(x, ((0, rp - R), (0, 0)))
    logits = pl.pallas_call(
        lm_head_kernel,
        out_shape=jax.ShapeDtypeStruct((rp, Vp), jnp.float32),
        grid=(rp // tm, Vp // tn),
        in_specs=[
            pl.BlockSpec((tm, C), lambda i, j: (i, 0)),
            pl.BlockSpec((1, C), lambda i, j: (0, 0)),
            pl.BlockSpec((1, C), lambda i, j: (0, 0)),
            pl.BlockSpec((tn, C), lambda i, j: (j, 0)),     # (V_pad, C) slice
        ],
        out_specs=pl.BlockSpec((tm, tn), lambda i, j: (i, j)),
        scratch_shapes=[pltpu.VMEM((tm, C), jnp.bfloat16)],
        compiler_params=pltpu.CompilerParams(
            dimension_semantics=("parallel", "arbitrary"),
            vmem_limit_bytes=_VMEM_LIMIT),
    )(x, lnw, lnb, w_head)
    return logits[:R, :vocab_size]


def gpt_forward(idx, params, n_head):
    B, T = idx.shape
    C = params["wpe"].shape[-1]
    H = n_head
    hd = C // H
    V = params["wte"].shape[0]

    # Embedding gathers are glue (plain JAX); heavy compute is in the kernels.
    x = params["wte"][idx] + params["wpe"][:T][None, :, :]      # (B, T, C) f32
    x = x.reshape(B * T, C)

    for p in params["blocks"]:
        qkv = run_qkv(x, p)                                      # (B*T, 3C) bf16
        y = run_attention(qkv, B, T, H, hd)                      # (B*T, C) bf16
        x = run_post_attn(x, y, p)                               # (B*T, C) f32

    logits = run_lm_head(x, params["ln_f_w"], params["ln_f_b"],
                         params["wte_head"], V)
    return logits.reshape(B, T, V)


# ---------------------------------------------------------------------------
# deterministic parameter init (mirrors GPT._init_weights; weights in bf16)
# ---------------------------------------------------------------------------
def init_params(key, cfg):
    C, V = cfg["n_embd"], cfg["vocab_size"]
    L, BS, H = cfg["n_layer"], cfg["block_size"], cfg["n_head"]
    std = 0.02
    proj_std = 0.02 * (2 * 1) ** -0.5      # NANOGPT_SCALE_INIT = 1
    attn_scale = 1.0 / math.sqrt(C // H)   # folded into q columns of W_qkv
    keys = jax.random.split(key, 2 + 4 * L)

    wte = std * jax.random.normal(keys[0], (V, C), jnp.float32)
    _, vp = _vocab_tiling(V)
    # persistent vocab-padded bf16 copy of the tied embedding for the lm_head
    wte_head = jnp.zeros((vp, C), jnp.bfloat16).at[:V].set(wte.astype(jnp.bfloat16))

    params = {
        "wte": wte,
        "wte_head": wte_head,
        "wpe": std * jax.random.normal(keys[1], (BS, C), jnp.float32),
        "ln_f_w": jnp.ones((1, C), jnp.float32),
        "ln_f_b": jnp.zeros((1, C), jnp.float32),
        "blocks": [],
    }
    for l in range(L):
        k = keys[2 + 4 * l: 2 + 4 * (l + 1)]
        w_qkv = std * jax.random.normal(k[0], (C, 3 * C), jnp.float32)
        w_qkv = w_qkv.at[:, :C].multiply(attn_scale)   # fold 1/sqrt(hd) into q
        params["blocks"].append({
            "ln1_w": jnp.ones((1, C), jnp.float32),
            "ln1_b": jnp.zeros((1, C), jnp.float32),
            "w_qkv": w_qkv.astype(jnp.bfloat16),
            "b_qkv": jnp.zeros((1, 3 * C), jnp.float32),
            "w_ap": (proj_std * jax.random.normal(k[1], (C, C), jnp.float32)
                     ).astype(jnp.bfloat16),
            "b_ap": jnp.zeros((1, C), jnp.float32),
            "ln2_w": jnp.ones((1, C), jnp.float32),
            "ln2_b": jnp.zeros((1, C), jnp.float32),
            "w_fc": (std * jax.random.normal(k[2], (C, 4 * C), jnp.float32)
                     ).astype(jnp.bfloat16),
            "b_fc": jnp.zeros((1, 4 * C), jnp.float32),
            "w_mp": (proj_std * jax.random.normal(k[3], (4 * C, C), jnp.float32)
                     ).astype(jnp.bfloat16),
            "b_mp": jnp.zeros((1, C), jnp.float32),
        })
    return params


# ---------------------------------------------------------------------------
# pure-JAX reference with matching precision policy (for correctness check)
# ---------------------------------------------------------------------------
def ref_forward(idx, params, n_head):
    B, T = idx.shape
    x = params["wte"][idx] + params["wpe"][:T][None]
    C = x.shape[-1]
    H, hd = n_head, C // n_head
    bf16, f32 = jnp.bfloat16, jnp.float32

    for p in params["blocks"]:
        h = _layernorm(x, p["ln1_w"], p["ln1_b"])
        qkv = (jnp.dot(h.astype(bf16), p["w_qkv"], preferred_element_type=f32)
               + p["b_qkv"]).astype(bf16)
        qkv = qkv.reshape(B, T, 3, H, hd)
        q = qkv[:, :, 0].transpose(0, 2, 1, 3)     # scale already folded in W_qkv
        k = qkv[:, :, 1].transpose(0, 2, 1, 3)
        v = qkv[:, :, 2].transpose(0, 2, 1, 3)
        s = jnp.einsum("bhtd,bhsd->bhts", q, k, preferred_element_type=f32)
        mask = jnp.tril(jnp.ones((T, T), bool))
        s = jnp.where(mask, s, -1e30)
        a = jax.nn.softmax(s, axis=-1)
        y = jnp.einsum("bhts,bhsd->bhtd", a.astype(bf16), v,
                       preferred_element_type=f32)
        y = y.transpose(0, 2, 1, 3).reshape(B, T, C).astype(bf16)
        x = x + jnp.dot(y, p["w_ap"], preferred_element_type=f32) + p["b_ap"]
        h2 = _layernorm(x, p["ln2_w"], p["ln2_b"])
        h2 = jnp.dot(h2.astype(bf16), p["w_fc"],
                     preferred_element_type=f32) + p["b_fc"]
        h2 = _gelu_tanh(h2)
        x = x + jnp.dot(h2.astype(bf16), p["w_mp"],
                        preferred_element_type=f32) + p["b_mp"]

    xf = _layernorm(x, params["ln_f_w"], params["ln_f_b"]).astype(bf16)
    V = params["wte"].shape[0]
    w = params["wte_head"][:V]
    return jnp.einsum("btc,vc->btv", xf, w, preferred_element_type=f32)


# ---------------------------------------------------------------------------
if __name__ == "__main__":
    cfg = dict(block_size=16, vocab_size=64, n_layer=2, n_head=4, n_embd=32)
    key = jax.random.PRNGKey(0)
    pkey, ikey = jax.random.split(key)
    params = init_params(pkey, cfg)

    B, T = 2, 8
    idx = jax.random.randint(ikey, (B, T), 0, cfg["vocab_size"], dtype=jnp.int32)

    fwd = jax.jit(functools.partial(gpt_forward, n_head=cfg["n_head"]))
    logits = jax.block_until_ready(fwd(idx, params))
    assert logits.shape == (B, T, cfg["vocab_size"])

    ref = ref_forward(idx, params, cfg["n_head"])
    max_err = float(jnp.max(jnp.abs(logits - ref)))
    assert max_err < 2e-2, f"max |err| = {max_err}"

    print("KERNEL_OK")
</pallas_src>

<mosaic_0001>
module attributes {stable_mosaic.version = 11 : i64} {
  func.func @attn_kernel(%arg0: i32, %arg1: i32, %arg2: memref<1x8x1x4x8xbf16, #tpu.memory_space<vmem>>, %arg3: memref<1x8x1x4x8xbf16, #tpu.memory_space<vmem>>, %arg4: memref<1x8x1x4x8xbf16, #tpu.memory_space<vmem>>, %arg5: memref<1x8x32xbf16, #tpu.memory_space<vmem>>) attributes {dimension_semantics = [#tpu.dimension_semantics<parallel>, #tpu.dimension_semantics<arbitrary>], iteration_bounds = array<i64: 2, 1>, scalar_prefetch = 0 : i64, scratch_operands = 0 : i64, tpu.core_type = #tpu.core_type<tc>, window_params = [{transform_indices = @transform_0, window_bounds = array<i64: 1, 8, 1, 4, 8>}, {transform_indices = @transform_1, window_bounds = array<i64: 1, 8, 1, 4, 8>}, {transform_indices = @transform_2, window_bounds = array<i64: 1, 8, 1, 4, 8>}, {transform_indices = @transform_3, window_bounds = array<i64: 1, 8, 32>}]} {
    %c0 = arith.constant 0 : index
    %c0_0 = arith.constant 0 : index
    %c0_1 = arith.constant 0 : index
    %c0_2 = arith.constant 0 : index
    %c0_3 = arith.constant 0 : index
    %0 = vector.load %arg2[%c0, %c0_0, %c0_1, %c0_2, %c0_3] : memref<1x8x1x4x8xbf16, #tpu.memory_space<vmem>>, vector<1x8x1x4x8xbf16>
    %1 = vector.shape_cast %0 : vector<1x8x1x4x8xbf16> to vector<8x4x8xbf16>
    %2 = tpu.transpose %1, [1, 0, 2] : vector<8x4x8xbf16> -> vector<4x8x8xbf16>
    %c8_i32 = arith.constant 8 : i32
    %3 = arith.muli %arg1, %c8_i32 : i32
    %4 = tpu.iota {dimensions = array<i32: 0>} : vector<8x8xi32>
    %5 = vector.broadcast %3 : i32 to vector<8x8xi32>
    %6 = arith.addi %5, %4 : vector<8x8xi32>
    %cst = arith.constant -1.000000e+30 : f32
    %7 = vector.broadcast %cst : f32 to vector<4x8x1xf32>
    %cst_4 = arith.constant 0.000000e+00 : f32
    %8 = vector.broadcast %cst_4 : f32 to vector<4x8x1xf32>
    %cst_5 = arith.constant 0.000000e+00 : f32
    %9 = vector.broadcast %cst_5 : f32 to vector<4x8x8xf32>
    %c1_i32 = arith.constant 1 : i32
    %10 = arith.addi %arg1, %c1_i32 : i32
    %c0_i32 = arith.constant 0 : i32
    %11 = arith.subi %10, %c0_i32 : i32
    %12 = arith.addi %c0_i32, %11 : i32
    %c1_i32_6 = arith.constant 1 : i32
    %13:3 = scf.for %arg6 = %c0_i32 to %12 step %c1_i32_6 iter_args(%arg7 = %7, %arg8 = %8, %arg9 = %9) -> (vector<4x8x1xf32>, vector<4x8x1xf32>, vector<4x8x8xf32>)  : i32 {
      %c8_i32_10 = arith.constant 8 : i32
      %23 = arith.muli %arg6, %c8_i32_10 : i32
      %24 = tpu.assume_multiple %23, 8 : i32
      %c0_11 = arith.constant 0 : index
      %25 = arith.index_cast %24 : i32 to index
      %c0_12 = arith.constant 0 : index
      %c0_13 = arith.constant 0 : index
      %c0_14 = arith.constant 0 : index
      %26 = vector.load %arg3[%c0_11, %25, %c0_12, %c0_13, %c0_14] : memref<1x8x1x4x8xbf16, #tpu.memory_space<vmem>>, vector<1x8x1x4x8xbf16>
      %27 = vector.shape_cast %26 : vector<1x8x1x4x8xbf16> to vector<8x4x8xbf16>
      %28 = tpu.transpose %27, [1, 0, 2] : vector<8x4x8xbf16> -> vector<4x8x8xbf16>
      %c0_15 = arith.constant 0 : index
      %29 = arith.index_cast %24 : i32 to index
      %c0_16 = arith.constant 0 : index
      %c0_17 = arith.constant 0 : index
      %c0_18 = arith.constant 0 : index
      %30 = vector.load %arg4[%c0_15, %29, %c0_16, %c0_17, %c0_18] : memref<1x8x1x4x8xbf16, #tpu.memory_space<vmem>>, vector<1x8x1x4x8xbf16>
      %31 = vector.shape_cast %30 : vector<1x8x1x4x8xbf16> to vector<8x4x8xbf16>
      %32 = tpu.transpose %31, [1, 0, 2] : vector<8x4x8xbf16> -> vector<4x8x8xbf16>
      "tpu.trace_start"() <{level = 10 : i32, message = "hqd,hkd->hqk"}> : () -> ()
      %cst_19 = arith.constant dense<0.000000e+00> : vector<4x8x8xf32>
      %33 = tpu.matmul %2, %28, %cst_19 {dimension_numbers = #tpu.dot_dimension_numbers<[2], [2], [1], [1], [0, 0, 0, 1, 1, 1], [0], [0]>} : vector<4x8x8xbf16>, vector<4x8x8xbf16>, vector<4x8x8xf32> -> vector<4x8x8xf32>
      "tpu.trace_stop"() : () -> ()
      %34 = tpu.iota {dimensions = array<i32: 1>} : vector<8x8xi32>
      %35 = vector.broadcast %24 : i32 to vector<8x8xi32>
      %36 = arith.addi %35, %34 : vector<8x8xi32>
      %37 = arith.cmpi sge, %6, %36 : vector<8x8xi32>
      %38 = vector.shape_cast %37 : vector<8x8xi1> to vector<1x8x8xi1>
      %cst_20 = arith.constant -1.000000e+30 : f32
      %39 = vector.shape_cast %38 : vector<1x8x8xi1> to vector<1x8x8xi1>
      %40 = vector.broadcast %39 : vector<1x8x8xi1> to vector<4x8x8xi1>
      %41 = vector.broadcast %cst_20 : f32 to vector<4x8x8xf32>
      %42 = arith.select %40, %33, %41 : vector<4x8x8xi1>, vector<4x8x8xf32>
      %cst_21 = arith.constant dense<0xFF800000> : vector<4x8xf32>
      %43 = vector.multi_reduction <maximumf>, %42, %cst_21 [2] : vector<4x8x8xf32> to vector<4x8xf32>
      %44 = vector.shape_cast %43 : vector<4x8xf32> to vector<4x8x1xf32>
      %45 = arith.maximumf %arg7, %44 : vector<4x8x1xf32>
      %46 = arith.subf %arg7, %45 : vector<4x8x1xf32>
      %47 = math.exp %46 : vector<4x8x1xf32>
      %48 = vector.broadcast %45 : vector<4x8x1xf32> to vector<4x8x8xf32>
      %49 = arith.subf %42, %48 : vector<4x8x8xf32>
      %50 = math.exp %49 : vector<4x8x8xf32>
      %51 = arith.mulf %47, %arg8 : vector<4x8x1xf32>
      %cst_22 = arith.constant dense<0.000000e+00> : vector<4x8xf32>
      %52 = vector.multi_reduction <add>, %50, %cst_22 [2] : vector<4x8x8xf32> to vector<4x8xf32>
      %53 = vector.shape_cast %52 : vector<4x8xf32> to vector<4x8x1xf32>
      %54 = arith.addf %51, %53 : vector<4x8x1xf32>
      %55 = vector.broadcast %47 : vector<4x8x1xf32> to vector<4x8x8xf32>
      %56 = arith.mulf %55, %arg9 : vector<4x8x8xf32>
      %57 = arith.truncf %50 : vector<4x8x8xf32> to vector<4x8x8xbf16>
      "tpu.trace_start"() <{level = 10 : i32, message = "hqk,hkd->hqd"}> : () -> ()
      %cst_23 = arith.constant dense<0.000000e+00> : vector<4x8x8xf32>
      %58 = tpu.matmul %57, %32, %cst_23 {dimension_numbers = #tpu.dot_dimension_numbers<[2], [1], [1], [2], [0, 0, 0, 1, 1, 2], [0], [0]>} : vector<4x8x8xbf16>, vector<4x8x8xbf16>, vector<4x8x8xf32> -> vector<4x8x8xf32>
      "tpu.trace_stop"() : () -> ()
      %59 = arith.addf %56, %58 : vector<4x8x8xf32>
      scf.yield %45, %54, %59 : vector<4x8x1xf32>, vector<4x8x1xf32>, vector<4x8x8xf32>
    }
    %14 = tpu.reciprocal %13#1 {approx = true} : vector<4x8x1xf32> -> vector<4x8x1xf32>
    %15 = vector.broadcast %14 : vector<4x8x1xf32> to vector<4x8x8xf32>
    %16 = arith.mulf %13#2, %15 : vector<4x8x8xf32>
    %17 = tpu.transpose %16, [1, 0, 2] : vector<4x8x8xf32> -> vector<8x4x8xf32>
    %18 = vector.shape_cast %17 : vector<8x4x8xf32> to vector<8x32xf32>
    %19 = arith.truncf %18 : vector<8x32xf32> to vector<8x32xbf16>
    %c0_7 = arith.constant 0 : index
    %c0_8 = arith.constant 0 : index
    %c0_9 = arith.constant 0 : index
    %20 = vector.load %arg5[%c0_7, %c0_8, %c0_9] : memref<1x8x32xbf16, #tpu.memory_space<vmem>>, vector<1x8x32xbf16>
    %21 = vector.shape_cast %20 : vector<1x8x32xbf16> to vector<8x32xbf16>
    %22 = vector.shape_cast %19 : vector<8x32xbf16> to vector<1x8x32xbf16>
    tpu.vector_store %arg5[%c0_7, %c0_8, %c0_9], %22 {strides = array<i32>} : memref<1x8x32xbf16, #tpu.memory_space<vmem>>, vector<1x8x32xbf16>,
    return
  }
  func.func @transform_0(%arg0: i32, %arg1: i32) -> (i32, i32, i32, i32, i32) {
    %c0_i32 = arith.constant 0 : i32
    %c0_i32_0 = arith.constant 0 : i32
    %c0_i32_1 = arith.constant 0 : i32
    %c0_i32_2 = arith.constant 0 : i32
    return %arg0, %arg1, %c0_i32, %c0_i32_0, %c0_i32_1 : i32, i32, i32, i32, i32
  }
  func.func @transform_1(%arg0: i32, %arg1: i32) -> (i32, i32, i32, i32, i32) {
    %c0_i32 = arith.constant 0 : i32
    %c1_i32 = arith.constant 1 : i32
    %c0_i32_0 = arith.constant 0 : i32
    %c0_i32_1 = arith.constant 0 : i32
    %c0_i32_2 = arith.constant 0 : i32
    return %arg0, %c0_i32, %c1_i32, %c0_i32_0, %c0_i32_1 : i32, i32, i32, i32, i32
  }
  func.func @transform_2(%arg0: i32, %arg1: i32) -> (i32, i32, i32, i32, i32) {
    %c0_i32 = arith.constant 0 : i32
    %c2_i32 = arith.constant 2 : i32
    %c0_i32_0 = arith.constant 0 : i32
    %c0_i32_1 = arith.constant 0 : i32
    %c0_i32_2 = arith.constant 0 : i32
    return %arg0, %c0_i32, %c2_i32, %c0_i32_0, %c0_i32_1 : i32, i32, i32, i32, i32
  }
  func.func @transform_3(%arg0: i32, %arg1: i32) -> (i32, i32, i32) {
    %c0_i32 = arith.constant 0 : i32
    %c0_i32_0 = arith.constant 0 : i32
    return %arg0, %arg1, %c0_i32 : i32, i32, i32
  }
}

module attributes {stable_mosaic.version = 11 : i64} {
  func.func @qkv_kernel(%arg0: i32, %arg1: memref<16x32xf32, #tpu.memory_space<vmem>>, %arg2: memref<1x32xf32, #tpu.memory_space<vmem>>, %arg3: memref<1x32xf32, #tpu.memory_space<vmem>>, %arg4: memref<32x96xbf16, #tpu.memory_space<vmem>>, %arg5: memref<1x96xf32, #tpu.memory_space<vmem>>, %arg6: memref<16x96xbf16, #tpu.memory_space<vmem>>) attributes {dimension_semantics = [#tpu.dimension_semantics<parallel>], iteration_bounds = array<i64: 1>, scalar_prefetch = 0 : i64, scratch_operands = 0 : i64, tpu.core_type = #tpu.core_type<tc>, window_params = [{transform_indices = @transform_0, window_bounds = array<i64: 16, 32>}, {pipeline_mode = #tpu.pipeline_mode<synchronous>, transform_indices = @transform_1, window_bounds = array<i64: 1, 32>}, {pipeline_mode = #tpu.pipeline_mode<synchronous>, transform_indices = @transform_2, window_bounds = array<i64: 1, 32>}, {pipeline_mode = #tpu.pipeline_mode<synchronous>, transform_indices = @transform_3, window_bounds = array<i64: 32, 96>}, {pipeline_mode = #tpu.pipeline_mode<synchronous>, transform_indices = @transform_4, window_bounds = array<i64: 1, 96>}, {transform_indices = @transform_5, window_bounds = array<i64: 16, 96>}]} {
    %c0 = arith.constant 0 : index
    %c0_0 = arith.constant 0 : index
    %0 = vector.load %arg1[%c0, %c0_0] : memref<16x32xf32, #tpu.memory_space<vmem>>, vector<16x32xf32>
    %c0_1 = arith.constant 0 : index
    %c0_2 = arith.constant 0 : index
    %1 = vector.load %arg2[%c0_1, %c0_2] : memref<1x32xf32, #tpu.memory_space<vmem>>, vector<1x32xf32>
    %c0_3 = arith.constant 0 : index
    %c0_4 = arith.constant 0 : index
    %2 = vector.load %arg3[%c0_3, %c0_4] : memref<1x32xf32, #tpu.memory_space<vmem>>, vector<1x32xf32>
    %cst = arith.constant dense<0.000000e+00> : vector<16xf32>
    %3 = vector.multi_reduction <add>, %0, %cst [1] : vector<16x32xf32> to vector<16xf32>
    %4 = vector.shape_cast %3 : vector<16xf32> to vector<16x1xf32>
    %cst_5 = arith.constant 3.200000e+01 : f32
    %5 = vector.broadcast %cst_5 : f32 to vector<16x1xf32>
    %6 = arith.divf %4, %5 : vector<16x1xf32>
    %7 = vector.broadcast %6 : vector<16x1xf32> to vector<16x32xf32>
    %8 = arith.subf %0, %7 : vector<16x32xf32>
    %9 = arith.mulf %8, %8 : vector<16x32xf32>
    %cst_6 = arith.constant dense<0.000000e+00> : vector<16xf32>
    %10 = vector.multi_reduction <add>, %9, %cst_6 [1] : vector<16x32xf32> to vector<16xf32>
    %11 = vector.shape_cast %10 : vector<16xf32> to vector<16x1xf32>
    %cst_7 = arith.constant 3.200000e+01 : f32
    %12 = vector.broadcast %cst_7 : f32 to vector<16x1xf32>
    %13 = arith.divf %11, %12 : vector<16x1xf32>
    %14 = vector.broadcast %6 : vector<16x1xf32> to vector<16x32xf32>
    %15 = arith.subf %0, %14 : vector<16x32xf32>
    %cst_8 = arith.constant 9.99999974E-6 : f32
    %16 = vector.broadcast %cst_8 : f32 to vector<16x1xf32>
    %17 = arith.addf %13, %16 : vector<16x1xf32>
    %18 = math.rsqrt %17 : vector<16x1xf32>
    %19 = vector.broadcast %18 : vector<16x1xf32> to vector<16x32xf32>
    %20 = arith.mulf %15, %19 : vector<16x32xf32>
    %21 = vector.broadcast %1 : vector<1x32xf32> to vector<16x32xf32>
    %22 = arith.mulf %20, %21 : vector<16x32xf32>
    %23 = vector.broadcast %2 : vector<1x32xf32> to vector<16x32xf32>
    %24 = arith.addf %22, %23 : vector<16x32xf32>
    %25 = arith.truncf %24 : vector<16x32xf32> to vector<16x32xbf16>
    %c0_9 = arith.constant 0 : index
    %c0_10 = arith.constant 0 : index
    %26 = vector.load %arg4[%c0_9, %c0_10] : memref<32x96xbf16, #tpu.memory_space<vmem>>, vector<32x96xbf16>
    %cst_11 = arith.constant dense<0.000000e+00> : vector<16x96xf32>
    %27 = tpu.matmul %25, %26, %cst_11 {dimension_numbers = #tpu.dot_dimension_numbers<[1], [0], [0], [1], [0, 0, 1, 1], [], []>} : vector<16x32xbf16>, vector<32x96xbf16>, vector<16x96xf32> -> vector<16x96xf32>
    %c0_12 = arith.constant 0 : index
    %c0_13 = arith.constant 0 : index
    %28 = vector.load %arg5[%c0_12, %c0_13] : memref<1x96xf32, #tpu.memory_space<vmem>>, vector<1x96xf32>
    %29 = vector.broadcast %28 : vector<1x96xf32> to vector<16x96xf32>
    %30 = arith.addf %27, %29 : vector<16x96xf32>
    %31 = arith.truncf %30 : vector<16x96xf32> to vector<16x96xbf16>
    %c0_14 = arith.constant 0 : index
    %c0_15 = arith.constant 0 : index
    %32 = vector.load %arg6[%c0_14, %c0_15] : memref<16x96xbf16, #tpu.memory_space<vmem>>, vector<16x96xbf16>
    tpu.vector_store %arg6[%c0_14, %c0_15], %31 {strides = array<i32>} : memref<16x96xbf16, #tpu.memory_space<vmem>>, vector<16x96xbf16>,
    return
  }
  func.func @transform_0(%arg0: i32) -> (i32, i32) {
    %c0_i32 = arith.constant 0 : i32
    %c0_i32_0 = arith.constant 0 : i32
    return %arg0, %c0_i32 : i32, i32
  }
  func.func @transform_1(%arg0: i32) -> (i32, i32) {
    %c0_i32 = arith.constant 0 : i32
    %c0_i32_0 = arith.constant 0 : i32
    %c0_i32_1 = arith.constant 0 : i32
    return %c0_i32, %c0_i32_0 : i32, i32
  }
  func.func @transform_2(%arg0: i32) -> (i32, i32) {
    %c0_i32 = arith.constant 0 : i32
    %c0_i32_0 = arith.constant 0 : i32
    %c0_i32_1 = arith.constant 0 : i32
    return %c0_i32, %c0_i32_0 : i32, i32
  }
  func.func @transform_3(%arg0: i32) -> (i32, i32) {
    %c0_i32 = arith.constant 0 : i32
    %c0_i32_0 = arith.constant 0 : i32
    %c0_i32_1 = arith.constant 0 : i32
    return %c0_i32, %c0_i32_0 : i32, i32
  }
  func.func @transform_4(%arg0: i32) -> (i32, i32) {
    %c0_i32 = arith.constant 0 : i32
    %c0_i32_0 = arith.constant 0 : i32
    %c0_i32_1 = arith.constant 0 : i32
    return %c0_i32, %c0_i32_0 : i32, i32
  }
  func.func @transform_5(%arg0: i32) -> (i32, i32) {
    %c0_i32 = arith.constant 0 : i32
    %c0_i32_0 = arith.constant 0 : i32
    return %arg0, %c0_i32 : i32, i32
  }
}

module attributes {stable_mosaic.version = 11 : i64} {
  func.func @post_attn_kernel(%arg0: i32, %arg1: memref<16x32xf32, #tpu.memory_space<vmem>>, %arg2: memref<16x32xbf16, #tpu.memory_space<vmem>>, %arg3: memref<32x32xbf16, #tpu.memory_space<vmem>>, %arg4: memref<1x32xf32, #tpu.memory_space<vmem>>, %arg5: memref<1x32xf32, #tpu.memory_space<vmem>>, %arg6: memref<1x32xf32, #tpu.memory_space<vmem>>, %arg7: memref<32x128xbf16, #tpu.memory_space<vmem>>, %arg8: memref<1x128xf32, #tpu.memory_space<vmem>>, %arg9: memref<128x32xbf16, #tpu.memory_space<vmem>>, %arg10: memref<1x32xf32, #tpu.memory_space<vmem>>, %arg11: memref<16x32xf32, #tpu.memory_space<vmem>>) attributes {dimension_semantics = [#tpu.dimension_semantics<parallel>], iteration_bounds = array<i64: 1>, scalar_prefetch = 0 : i64, scratch_operands = 0 : i64, tpu.core_type = #tpu.core_type<tc>, window_params = [{transform_indices = @transform_0, window_bounds = array<i64: 16, 32>}, {transform_indices = @transform_1, window_bounds = array<i64: 16, 32>}, {pipeline_mode = #tpu.pipeline_mode<synchronous>, transform_indices = @transform_2, window_bounds = array<i64: 32, 32>}, {pipeline_mode = #tpu.pipeline_mode<synchronous>, transform_indices = @transform_3, window_bounds = array<i64: 1, 32>}, {pipeline_mode = #tpu.pipeline_mode<synchronous>, transform_indices = @transform_4, window_bounds = array<i64: 1, 32>}, {pipeline_mode = #tpu.pipeline_mode<synchronous>, transform_indices = @transform_5, window_bounds = array<i64: 1, 32>}, {pipeline_mode = #tpu.pipeline_mode<synchronous>, transform_indices = @transform_6, window_bounds = array<i64: 32, 128>}, {pipeline_mode = #tpu.pipeline_mode<synchronous>, transform_indices = @transform_7, window_bounds = array<i64: 1, 128>}, {pipeline_mode = #tpu.pipeline_mode<synchronous>, transform_indices = @transform_8, window_bounds = array<i64: 128, 32>}, {pipeline_mode = #tpu.pipeline_mode<synchronous>, transform_indices = @transform_9, window_bounds = array<i64: 1, 32>}, {transform_indices = @transform_10, window_bounds = array<i64: 16, 32>}]} {
    %c0 = arith.constant 0 : index
    %c0_0 = arith.constant 0 : index
    %0 = vector.load %arg1[%c0, %c0_0] : memref<16x32xf32, #tpu.memory_space<vmem>>, vector<16x32xf32>
    %c0_1 = arith.constant 0 : index
    %c0_2 = arith.constant 0 : index
    %1 = vector.load %arg2[%c0_1, %c0_2] : memref<16x32xbf16, #tpu.memory_space<vmem>>, vector<16x32xbf16>
    %c0_3 = arith.constant 0 : index
    %c0_4 = arith.constant 0 : index
    %2 = vector.load %arg3[%c0_3, %c0_4] : memref<32x32xbf16, #tpu.memory_space<vmem>>, vector<32x32xbf16>
    %cst = arith.constant dense<0.000000e+00> : vector<16x32xf32>
    %3 = tpu.matmul %1, %2, %cst {dimension_numbers = #tpu.dot_dimension_numbers<[1], [0], [0], [1], [0, 0, 1, 1], [], []>} : vector<16x32xbf16>, vector<32x32xbf16>, vector<16x32xf32> -> vector<16x32xf32>
    %4 = arith.addf %0, %3 : vector<16x32xf32>
    %c0_5 = arith.constant 0 : index
    %c0_6 = arith.constant 0 : index
    %5 = vector.load %arg4[%c0_5, %c0_6] : memref<1x32xf32, #tpu.memory_space<vmem>>, vector<1x32xf32>
    %6 = vector.broadcast %5 : vector<1x32xf32> to vector<16x32xf32>
    %7 = arith.addf %4, %6 : vector<16x32xf32>
    %c0_7 = arith.constant 0 : index
    %c0_8 = arith.constant 0 : index
    %8 = vector.load %arg5[%c0_7, %c0_8] : memref<1x32xf32, #tpu.memory_space<vmem>>, vector<1x32xf32>
    %c0_9 = arith.constant 0 : index
    %c0_10 = arith.constant 0 : index
    %9 = vector.load %arg6[%c0_9, %c0_10] : memref<1x32xf32, #tpu.memory_space<vmem>>, vector<1x32xf32>
    %cst_11 = arith.constant dense<0.000000e+00> : vector<16xf32>
    %10 = vector.multi_reduction <add>, %7, %cst_11 [1] : vector<16x32xf32> to vector<16xf32>
    %11 = vector.shape_cast %10 : vector<16xf32> to vector<16x1xf32>
    %cst_12 = arith.constant 3.200000e+01 : f32
    %12 = vector.broadcast %cst_12 : f32 to vector<16x1xf32>
    %13 = arith.divf %11, %12 : vector<16x1xf32>
    %14 = vector.broadcast %13 : vector<16x1xf32> to vector<16x32xf32>
    %15 = arith.subf %7, %14 : vector<16x32xf32>
    %16 = arith.mulf %15, %15 : vector<16x32xf32>
    %cst_13 = arith.constant dense<0.000000e+00> : vector<16xf32>
    %17 = vector.multi_reduction <add>, %16, %cst_13 [1] : vector<16x32xf32> to vector<16xf32>
    %18 = vector.shape_cast %17 : vector<16xf32> to vector<16x1xf32>
    %cst_14 = arith.constant 3.200000e+01 : f32
    %19 = vector.broadcast %cst_14 : f32 to vector<16x1xf32>
    %20 = arith.divf %18, %19 : vector<16x1xf32>
    %21 = vector.broadcast %13 : vector<16x1xf32> to vector<16x32xf32>
    %22 = arith.subf %7, %21 : vector<16x32xf32>
    %cst_15 = arith.constant 9.99999974E-6 : f32
    %23 = vector.broadcast %cst_15 : f32 to vector<16x1xf32>
    %24 = arith.addf %20, %23 : vector<16x1xf32>
    %25 = math.rsqrt %24 : vector<16x1xf32>
    %26 = vector.broadcast %25 : vector<16x1xf32> to vector<16x32xf32>
    %27 = arith.mulf %22, %26 : vector<16x32xf32>
    %28 = vector.broadcast %8 : vector<1x32xf32> to vector<16x32xf32>
    %29 = arith.mulf %27, %28 : vector<16x32xf32>
    %30 = vector.broadcast %9 : vector<1x32xf32> to vector<16x32xf32>
    %31 = arith.addf %29, %30 : vector<16x32xf32>
    %32 = arith.truncf %31 : vector<16x32xf32> to vector<16x32xbf16>
    %c0_16 = arith.constant 0 : index
    %c0_17 = arith.constant 0 : index
    %33 = vector.load %arg7[%c0_16, %c0_17] : memref<32x128xbf16, #tpu.memory_space<vmem>>, vector<32x128xbf16>
    %cst_18 = arith.constant dense<0.000000e+00> : vector<16x128xf32>
    %34 = tpu.matmul %32, %33, %cst_18 {dimension_numbers = #tpu.dot_dimension_numbers<[1], [0], [0], [1], [0, 0, 1, 1], [], []>} : vector<16x32xbf16>, vector<32x128xbf16>, vector<16x128xf32> -> vector<16x128xf32>
    %c0_19 = arith.constant 0 : index
    %c0_20 = arith.constant 0 : index
    %35 = vector.load %arg8[%c0_19, %c0_20] : memref<1x128xf32, #tpu.memory_space<vmem>>, vector<1x128xf32>
    %36 = vector.broadcast %35 : vector<1x128xf32> to vector<16x128xf32>
    %37 = arith.addf %34, %36 : vector<16x128xf32>
    %cst_21 = arith.constant 5.000000e-01 : f32
    %38 = vector.broadcast %cst_21 : f32 to vector<16x128xf32>
    %39 = arith.mulf %38, %37 : vector<16x128xf32>
    %cst_22 = arith.constant 4.471500e-02 : f32
    %40 = vector.broadcast %cst_22 : f32 to vector<16x128xf32>
    %41 = arith.mulf %40, %37 : vector<16x128xf32>
    %42 = arith.mulf %41, %37 : vector<16x128xf32>
    %43 = arith.mulf %42, %37 : vector<16x128xf32>
    %44 = arith.addf %37, %43 : vector<16x128xf32>
    %cst_23 = arith.constant 0.797884583 : f32
    %45 = vector.broadcast %cst_23 : f32 to vector<16x128xf32>
    %46 = arith.mulf %45, %44 : vector<16x128xf32>
    %47 = math.tanh %46 : vector<16x128xf32>
    %cst_24 = arith.constant 1.000000e+00 : f32
    %48 = vector.broadcast %cst_24 : f32 to vector<16x128xf32>
    %49 = arith.addf %48, %47 : vector<16x128xf32>
    %50 = arith.mulf %39, %49 : vector<16x128xf32>
    %51 = arith.truncf %50 : vector<16x128xf32> to vector<16x128xbf16>
    %c0_25 = arith.constant 0 : index
    %c0_26 = arith.constant 0 : index
    %52 = vector.load %arg9[%c0_25, %c0_26] : memref<128x32xbf16, #tpu.memory_space<vmem>>, vector<128x32xbf16>
    %cst_27 = arith.constant dense<0.000000e+00> : vector<16x32xf32>
    %53 = tpu.matmul %51, %52, %cst_27 {dimension_numbers = #tpu.dot_dimension_numbers<[1], [0], [0], [1], [0, 0, 1, 1], [], []>} : vector<16x128xbf16>, vector<128x32xbf16>, vector<16x32xf32> -> vector<16x32xf32>
    %54 = arith.addf %7, %53 : vector<16x32xf32>
    %c0_28 = arith.constant 0 : index
    %c0_29 = arith.constant 0 : index
    %55 = vector.load %arg10[%c0_28, %c0_29] : memref<1x32xf32, #tpu.memory_space<vmem>>, vector<1x32xf32>
    %56 = vector.broadcast %55 : vector<1x32xf32> to vector<16x32xf32>
    %57 = arith.addf %54, %56 : vector<16x32xf32>
    %c0_30 = arith.constant 0 : index
    %c0_31 = arith.constant 0 : index
    %58 = vector.load %arg11[%c0_30, %c0_31] : memref<16x32xf32, #tpu.memory_space<vmem>>, vector<16x32xf32>
    tpu.vector_store %arg11[%c0_30, %c0_31], %57 {strides = array<i32>} : memref<16x32xf32, #tpu.memory_space<vmem>>, vector<16x32xf32>,
    return
  }
  func.func @transform_0(%arg0: i32) -> (i32, i32) {
    %c0_i32 = arith.constant 0 : i32
    %c0_i32_0 = arith.constant 0 : i32
    return %arg0, %c0_i32 : i32, i32
  }
  func.func @transform_1(%arg0: i32) -> (i32, i32) {
    %c0_i32 = arith.constant 0 : i32
    %c0_i32_0 = arith.constant 0 : i32
    return %arg0, %c0_i32 : i32, i32
  }
  func.func @transform_2(%arg0: i32) -> (i32, i32) {
    %c0_i32 = arith.constant 0 : i32
    %c0_i32_0 = arith.constant 0 : i32
    %c0_i32_1 = arith.constant 0 : i32
    return %c0_i32, %c0_i32_0 : i32, i32
  }
  func.func @transform_3(%arg0: i32) -> (i32, i32) {
    %c0_i32 = arith.constant 0 : i32
    %c0_i32_0 = arith.constant 0 : i32
    %c0_i32_1 = arith.constant 0 : i32
    return %c0_i32, %c0_i32_0 : i32, i32
  }
  func.func @transform_4(%arg0: i32) -> (i32, i32) {
    %c0_i32 = arith.constant 0 : i32
    %c0_i32_0 = arith.constant 0 : i32
    %c0_i32_1 = arith.constant 0 : i32
    return %c0_i32, %c0_i32_0 : i32, i32
  }
  func.func @transform_5(%arg0: i32) -> (i32, i32) {
    %c0_i32 = arith.constant 0 : i32
    %c0_i32_0 = arith.constant 0 : i32
    %c0_i32_1 = arith.constant 0 : i32
    return %c0_i32, %c0_i32_0 : i32, i32
  }
  func.func @transform_6(%arg0: i32) -> (i32, i32) {
    %c0_i32 = arith.constant 0 : i32
    %c0_i32_0 = arith.constant 0 : i32
    %c0_i32_1 = arith.constant 0 : i32
    return %c0_i32, %c0_i32_0 : i32, i32
  }
  func.func @transform_7(%arg0: i32) -> (i32, i32) {
    %c0_i32 = arith.constant 0 : i32
    %c0_i32_0 = arith.constant 0 : i32
    %c0_i32_1 = arith.constant 0 : i32
    return %c0_i32, %c0_i32_0 : i32, i32
  }
  func.func @transform_8(%arg0: i32) -> (i32, i32) {
    %c0_i32 = arith.constant 0 : i32
    %c0_i32_0 = arith.constant 0 : i32
    %c0_i32_1 = arith.constant 0 : i32
    return %c0_i32, %c0_i32_0 : i32, i32
  }
  func.func @transform_9(%arg0: i32) -> (i32, i32) {
    %c0_i32 = arith.constant 0 : i32
    %c0_i32_0 = arith.constant 0 : i32
    %c0_i32_1 = arith.constant 0 : i32
    return %c0_i32, %c0_i32_0 : i32, i32
  }
  func.func @transform_10(%arg0: i32) -> (i32, i32) {
    %c0_i32 = arith.constant 0 : i32
    %c0_i32_0 = arith.constant 0 : i32
    return %arg0, %c0_i32 : i32, i32
  }
}

module attributes {stable_mosaic.version = 11 : i64} {
  func.func @lm_head_kernel(%arg0: i32, %arg1: i32, %arg2: memref<16x32xf32, #tpu.memory_space<vmem>>, %arg3: memref<1x32xf32, #tpu.memory_space<vmem>>, %arg4: memref<1x32xf32, #tpu.memory_space<vmem>>, %arg5: memref<128x32xbf16, #tpu.memory_space<vmem>>, %arg6: memref<16x128xf32, #tpu.memory_space<vmem>>, %arg7: memref<16x32xbf16, #tpu.memory_space<vmem>>) attributes {dimension_semantics = [#tpu.dimension_semantics<parallel>, #tpu.dimension_semantics<arbitrary>], iteration_bounds = array<i64: 1, 1>, scalar_prefetch = 0 : i64, scratch_operands = 1 : i64, tpu.core_type = #tpu.core_type<tc>, window_params = [{transform_indices = @transform_0, window_bounds = array<i64: 16, 32>}, {pipeline_mode = #tpu.pipeline_mode<synchronous>, transform_indices = @transform_1, window_bounds = array<i64: 1, 32>}, {pipeline_mode = #tpu.pipeline_mode<synchronous>, transform_indices = @transform_2, window_bounds = array<i64: 1, 32>}, {transform_indices = @transform_3, window_bounds = array<i64: 128, 32>}, {transform_indices = @transform_4, window_bounds = array<i64: 16, 128>}]} {
    %c0_i32 = arith.constant 0 : i32
    %0 = arith.cmpi eq, %arg1, %c0_i32 : i32
    %1 = arith.extui %0 : i1 to i32
    %c0_i32_0 = arith.constant 0 : i32
    %2 = arith.cmpi ne, %1, %c0_i32_0 : i32
    scf.if %2 {
      %c0_6 = arith.constant 0 : index
      %c0_7 = arith.constant 0 : index
      %7 = vector.load %arg2[%c0_6, %c0_7] : memref<16x32xf32, #tpu.memory_space<vmem>>, vector<16x32xf32>
      %c0_8 = arith.constant 0 : index
      %c0_9 = arith.constant 0 : index
      %8 = vector.load %arg3[%c0_8, %c0_9] : memref<1x32xf32, #tpu.memory_space<vmem>>, vector<1x32xf32>
      %c0_10 = arith.constant 0 : index
      %c0_11 = arith.constant 0 : index
      %9 = vector.load %arg4[%c0_10, %c0_11] : memref<1x32xf32, #tpu.memory_space<vmem>>, vector<1x32xf32>
      %cst_12 = arith.constant dense<0.000000e+00> : vector<16xf32>
      %10 = vector.multi_reduction <add>, %7, %cst_12 [1] : vector<16x32xf32> to vector<16xf32>
      %11 = vector.shape_cast %10 : vector<16xf32> to vector<16x1xf32>
      %cst_13 = arith.constant 3.200000e+01 : f32
      %12 = vector.broadcast %cst_13 : f32 to vector<16x1xf32>
      %13 = arith.divf %11, %12 : vector<16x1xf32>
      %14 = vector.broadcast %13 : vector<16x1xf32> to vector<16x32xf32>
      %15 = arith.subf %7, %14 : vector<16x32xf32>
      %16 = arith.mulf %15, %15 : vector<16x32xf32>
      %cst_14 = arith.constant dense<0.000000e+00> : vector<16xf32>
      %17 = vector.multi_reduction <add>, %16, %cst_14 [1] : vector<16x32xf32> to vector<16xf32>
      %18 = vector.shape_cast %17 : vector<16xf32> to vector<16x1xf32>
      %cst_15 = arith.constant 3.200000e+01 : f32
      %19 = vector.broadcast %cst_15 : f32 to vector<16x1xf32>
      %20 = arith.divf %18, %19 : vector<16x1xf32>
      %21 = vector.broadcast %13 : vector<16x1xf32> to vector<16x32xf32>
      %22 = arith.subf %7, %21 : vector<16x32xf32>
      %cst_16 = arith.constant 9.99999974E-6 : f32
      %23 = vector.broadcast %cst_16 : f32 to vector<16x1xf32>
      %24 = arith.addf %20, %23 : vector<16x1xf32>
      %25 = math.rsqrt %24 : vector<16x1xf32>
      %26 = vector.broadcast %25 : vector<16x1xf32> to vector<16x32xf32>
      %27 = arith.mulf %22, %26 : vector<16x32xf32>
      %28 = vector.broadcast %8 : vector<1x32xf32> to vector<16x32xf32>
      %29 = arith.mulf %27, %28 : vector<16x32xf32>
      %30 = vector.broadcast %9 : vector<1x32xf32> to vector<16x32xf32>
      %31 = arith.addf %29, %30 : vector<16x32xf32>
      %32 = arith.truncf %31 : vector<16x32xf32> to vector<16x32xbf16>
      %c0_17 = arith.constant 0 : index
      %c0_18 = arith.constant 0 : index
      %33 = vector.load %arg7[%c0_17, %c0_18] : memref<16x32xbf16, #tpu.memory_space<vmem>>, vector<16x32xbf16>
      tpu.vector_store %arg7[%c0_17, %c0_18], %32 {strides = array<i32>} : memref<16x32xbf16, #tpu.memory_space<vmem>>, vector<16x32xbf16>,
    } else {
    }
    %c0 = arith.constant 0 : index
    %c0_1 = arith.constant 0 : index
    %3 = vector.load %arg7[%c0, %c0_1] : memref<16x32xbf16, #tpu.memory_space<vmem>>, vector<16x32xbf16>
    %c0_2 = arith.constant 0 : index
    %c0_3 = arith.constant 0 : index
    %4 = vector.load %arg5[%c0_2, %c0_3] : memref<128x32xbf16, #tpu.memory_space<vmem>>, vector<128x32xbf16>
    "tpu.trace_start"() <{level = 10 : i32, message = "mc,vc->mv"}> : () -> ()
    %cst = arith.constant dense<0.000000e+00> : vector<16x128xf32>
    %5 = tpu.matmul %3, %4, %cst {dimension_numbers = #tpu.dot_dimension_numbers<[1], [1], [0], [0], [0, 0, 1, 0], [], []>} : vector<16x32xbf16>, vector<128x32xbf16>, vector<16x128xf32> -> vector<16x128xf32>
    "tpu.trace_stop"() : () -> ()
    %c0_4 = arith.constant 0 : index
    %c0_5 = arith.constant 0 : index
    %6 = vector.load %arg6[%c0_4, %c0_5] : memref<16x128xf32, #tpu.memory_space<vmem>>, vector<16x128xf32>
    tpu.vector_store %arg6[%c0_4, %c0_5], %5 {strides = array<i32>} : memref<16x128xf32, #tpu.memory_space<vmem>>, vector<16x128xf32>,
    return
  }
  func.func @transform_0(%arg0: i32, %arg1: i32) -> (i32, i32) {
    %c0_i32 = arith.constant 0 : i32
    %c0_i32_0 = arith.constant 0 : i32
    return %arg0, %c0_i32 : i32, i32
  }
  func.func @transform_1(%arg0: i32, %arg1: i32) -> (i32, i32) {
    %c0_i32 = arith.constant 0 : i32
    %c0_i32_0 = arith.constant 0 : i32
    %c0_i32_1 = arith.constant 0 : i32
    return %c0_i32, %c0_i32_0 : i32, i32
  }
  func.func @transform_2(%arg0: i32, %arg1: i32) -> (i32, i32) {
    %c0_i32 = arith.constant 0 : i32
    %c0_i32_0 = arith.constant 0 : i32
    %c0_i32_1 = arith.constant 0 : i32
    return %c0_i32, %c0_i32_0 : i32, i32
  }
  func.func @transform_3(%arg0: i32, %arg1: i32) -> (i32, i32) {
    %c0_i32 = arith.constant 0 : i32
    %c0_i32_0 = arith.constant 0 : i32
    return %arg1, %c0_i32 : i32, i32
  }
  func.func @transform_4(%arg0: i32, %arg1: i32) -> (i32, i32) {
    %c0_i32 = arith.constant 0 : i32
    return %arg0, %arg1 : i32, i32
  }
}

</mosaic_0001>

<llo_original>
// kernel: gpt_forward.7
$region0: #{gpt_forward.7}
  #allocation0 [shape = 'u32[]', space=smem, size = 0x4, offset = 0x4, fixed_abs, tag = 'smem constant byte address 0x4 - core index']
  #allocation1 [shape = 'u32[144,128]{1,0:T(1,128)}', space=vmem, size = 0x12000, scoped, tag = 'internal scratch']
  %s0 = inlined_call_operand.vmem [shape: f32[16,32], index: 0, kind: input, shape index: {}]
  %s1 = inlined_call_operand.vmem [shape: f32[1,32], index: 1, kind: input, shape index: {}]
  %s2 = inlined_call_operand.vmem [shape: f32[1,32], index: 2, kind: input, shape index: {}]
  %s3 = inlined_call_operand.vmem [shape: bf16[32,96], index: 3, kind: input, shape index: {}]
  %s4 = inlined_call_operand.vmem [shape: f32[1,96], index: 4, kind: input, shape index: {}]
  %s5 = inlined_call_operand.vmem [shape: bf16[16,96], index: 5, kind: output, shape index: {}]
  %s6 = sld [smem:[#allocation0]]
  $region30: #{gpt_forward.7} parent=0
    _
  %s8 = ssub.s32 1, %s6
  %s9 = scalar_select 0, %s8, %s6
  // Predicated region
  $region2: #{gpt_forward.7} parent=0 // pred_check
    _
  $region3: #{gpt_forward.7} parent=0 // pred_check_branch
    %11 = sbr.rel (0) target = $region5
  $region4: #{gpt_forward.7} parent=0 // pred_region
    _
  $region5: #{gpt_forward.7} parent=0 // pred_fallthru
    _
  // Predicated region
  $region6: #{gpt_forward.7} parent=0 // pred_check
    _
  $region7: #{gpt_forward.7} parent=0 // pred_check_branch
    %13 = sbr.rel (0) target = $region9
  $region8: #{gpt_forward.7} parent=0 // pred_region
    _
  $region9: #{gpt_forward.7} parent=0 // pred_fallthru
    _
  // Predicated region
  $region10: #{gpt_forward.7} parent=0 // pred_check
    _
  $region11: #{gpt_forward.7} parent=0 // pred_check_branch
    %15 = sbr.rel (0) target = $region13
  $region12: #{gpt_forward.7} parent=0 // pred_region
    _
  $region13: #{gpt_forward.7} parent=0 // pred_fallthru
    _
  // Predicated region
  $region14: #{gpt_forward.7} parent=0 // pred_check
    _
  $region15: #{gpt_forward.7} parent=0 // pred_check_branch
    %17 = sbr.rel (0) target = $region17
  $region16: #{gpt_forward.7} parent=0 // pred_region
    _
  $region17: #{gpt_forward.7} parent=0 // pred_fallthru
    _
  // Predicated region
  $region18: #{gpt_forward.7} parent=0 // pred_check
    _
  $region19: #{gpt_forward.7} parent=0 // pred_check_branch
    %19 = sbr.rel (0) target = $region21
  $region20: #{gpt_forward.7} parent=0 // pred_region
    _
  $region21: #{gpt_forward.7} parent=0 // pred_fallthru
    _
  %v21 = vld [vmem:[%s0] sm:$0xff]
  %v22 = vld [vmem:[%s0 + $0x8] sm:$0xff]
  %v23 = vld [vmem:[%s1] sm:$0x1]
  %v24 = vld [vmem:[%s2] sm:$0x1]
  %vm25 = vcmask 261120
  %v26 = vsel %vm25, %v21, 0.0
  %27 = vadd.xlane.f32.xlu0 %v26
  %v28 = vpop.xlane.xlu0 %27
  %v29 = vsel %vm25, %v22, 0.0
  %30 = vadd.xlane.f32.xlu0 %v29
  %v31 = vpop.xlane.xlu0 %30
  %v32 = vrcp.pop 32.0
  %v33 = vmul.f32 %v28, %v32
  %v34 = vmul.f32 %v31, %v32
  %v35 = vsub.f32 %v21, %v33
  %v36 = vsub.f32 %v22, %v34
  %v37 = vmul.f32 %v35, %v35
  %v38 = vmul.f32 %v36, %v36
  %v39 = vsel %vm25, %v37, 0.0
  %40 = vadd.xlane.f32.xlu0 %v39
  %v41 = vpop.xlane.xlu0 %40
  %v42 = vsel %vm25, %v38, 0.0
  %43 = vadd.xlane.f32.xlu0 %v42
  %v44 = vpop.xlane.xlu0 %43
  %v45 = vmul.f32 %v41, %v32
  %v46 = vmul.f32 %v44, %v32
  %v47 = vadd.f32 %v45, 1e-05
  %v48 = vadd.f32 %v46, 1e-05
  %v49 = vrsqrt.pop %v47
  %v50 = vrsqrt.pop %v48
  %v51 = vmul.f32 %v35, %v49
  %v52 = vmul.f32 %v36, %v50
  %v54 = vlaneseq
  %v55 = vshrl.u32 %v54, 7
  %v56 = vsub.s32 0, %v55
  %v57 = vrot.slane %v23, %v56
  %v59 = vmul.f32 %v51, %v57
  %v60 = vmul.f32 %v52, %v57
  %v62 = vlaneseq
  %v63 = vshrl.u32 %v62, 7
  %v64 = vsub.s32 0, %v63
  %v65 = vrot.slane %v24, %v64
  %v67 = vadd.f32 %v59, %v65
  %v68 = vadd.f32 %v60, %v65
  %v69 = vpack.c.bf16 %v68, %v67
  %v70 = vld [vmem:[%s3] sm:$0xf]
  %v71 = vld [vmem:[%s3 + $0x4] sm:$0xf]
  %v72 = vld [vmem:[%s3 + $0x8] sm:$0xf]
  %v73 = vld [vmem:[%s3 + $0xc] sm:$0xf]
  %v74 = vld [vmem:[%s4] sm:$0x1]
  %v76 = vlaneseq
  %v77 = vshrl.u32 %v76, 7
  %v78 = vsub.s32 0, %v77
  %v79 = vrot.slane %v74, %v78
  %v85 = vunpack.c.l.b16 %v70
  %v86 = vunpack.c.l.b16 %v71
  %v87 = vunpack.c.l.b16 %v72
  %v88 = vunpack.c.l.b16 %v73
  %v89 = vpack.c.b16 %v86, %v85
  %v90 = vpack.c.b16 %v88, %v87
  %v94 = vsel %vm25, %v69, 0
  %96 = vmatprep.subr.bf16.mxu0 0
  %97 = vmatpush1.bf16.msra.mxu0 %v89
  %98 = vmatprep.subr.bf16.mxu0 0
  %99 = vmatpush1.bf16.msra.mxu0 %v90
  %100 = vmatprep.subr.bf16.mxu0 0
  %101 = vmatpush1.bf16.msra.mxu0 0
  %102 = vmatprep.subr.bf16.mxu0 0
  %103 = vmatpush1.bf16.msra.mxu0 0
  %104 = vmatprep.subr.bf16.mxu0 0
  %105 = vmatpush1.bf16.msra.mxu0 0
  %106 = vmatprep.subr.bf16.mxu0 0
  %107 = vmatpush1.bf16.msra.mxu0 0
  %108 = vmatprep.subr.bf16.mxu0 0
  %109 = vmatpush1.bf16.msra.mxu0 0
  %110 = vmatprep.subr.bf16.mxu0 0
  %111 = vmatpush1.bf16.msra.mxu0 0
  %112 = vmatprep.subr.bf16.mxu0 0
  %113 = vmatpush1.bf16.msra.mxu0 0
  %114 = vmatprep.subr.bf16.mxu0 0
  %115 = vmatpush1.bf16.msra.mxu0 0
  %116 = vmatprep.subr.bf16.mxu0 0
  %117 = vmatpush1.bf16.msra.mxu0 0
  %118 = vmatprep.subr.bf16.mxu0 0
  %119 = vmatpush1.bf16.msra.mxu0 0
  %120 = vmatprep.subr.bf16.mxu0 0
  %121 = vmatpush1.bf16.msra.mxu0 0
  %122 = vmatprep.subr.bf16.mxu0 0
  %123 = vmatpush1.bf16.msra.mxu0 0
  %124 = vmatprep.subr.bf16.mxu0 0
  %125 = vmatpush1.bf16.msra.mxu0 0
  %126 = vmatprep.subr.bf16.mxu0 0
  %127 = vmatpush1.bf16.msra.mxu0 0
  %128 = vmatprep.mubr.bf16.mxu0 0
  %129 = vmatmul.mubr.bf16.gmra.mrb[0].mxu0 %v94
  %v130 = vpop.f32.mrb[0].mxu0
  %v131 = vadd.f32 %v79, %v130
  %v132 = vpop.f32.mrb[0].mxu0
  %v133 = vpop.f32.mrb[0].mxu0
  %v134 = vadd.f32 %v79, %v133
  %v135 = vpop.f32.mrb[0].mxu0
  %136 = vdwg.mxu0
  %v137 = vpack.c.bf16 %v134, %v131
  %v139 = vunpack.c.l.b16 %v137
  %v140 = vunpack.c.h.b16 %v137
  %v141 = vpack.c.b16 %v139, %v139
  %v142 = vpack.c.b16 %v140, %v140
  %vm145 = vcmask 781312
  %146 = vst.msk [vmem:[%s5] sm:$0xf] %vm145, %v141
  %147 = vst.msk [vmem:[%s5 + $0x4] sm:$0xf] %vm145, %v142
  // Predicated region
  $region22: #{gpt_forward.7} parent=0 // pred_check
    _
  $region23: #{gpt_forward.7} parent=0 // pred_check_branch
    %149 = sbr.rel (0) target = $region25
  $region24: #{gpt_forward.7} parent=0 // pred_region
    _
  $region25: #{gpt_forward.7} parent=0 // pred_fallthru
    _
  // Predicated region
  $region26: #{gpt_forward.7} parent=0 // pred_check
    _
  $region27: #{gpt_forward.7} parent=0 // pred_check_branch
    %151 = sbr.rel (0) target = $region29
  $region28: #{gpt_forward.7} parent=0 // pred_region
    _
  $region29: #{gpt_forward.7} parent=0 // pred_fallthru
    _

// kernel: gpt_forward.13
$region0: #{gpt_forward.13}
  #allocation0 [shape = 'u32[]', space=smem, size = 0x4, offset = 0x4, fixed_abs, tag = 'smem constant byte address 0x4 - core index']
  #allocation1 [shape = 'u32[144,128]{1,0:T(1,128)}', space=vmem, size = 0x12000, scoped, tag = 'internal scratch']
  #allocation2 [shape = 'bf16[16,32]{1,0:T(16,128)(2,1)}', space=vmem, size = 0x1000, scoped, tag = 'scratch operand']
  %s0 = inlined_call_operand.vmem [shape: f32[16,32], index: 0, kind: input, shape index: {}]
  %s1 = inlined_call_operand.vmem [shape: f32[1,32], index: 1, kind: input, shape index: {}]
  %s2 = inlined_call_operand.vmem [shape: f32[1,32], index: 2, kind: input, shape index: {}]
  %s3 = inlined_call_operand.vmem [shape: bf16[128,32], index: 3, kind: input, shape index: {}]
  %s4 = inlined_call_operand.vmem [shape: f32[16,128], index: 4, kind: output, shape index: {}]
  %s5 = sld [smem:[#allocation0]]
  $region30: #{gpt_forward.13} parent=0
    _
  %s7 = ssub.s32 1, %s5
  %s8 = scalar_select 0, %s7, %s5
  // Predicated region
  $region2: #{gpt_forward.13} parent=0 // pred_check
    _
  $region3: #{gpt_forward.13} parent=0 // pred_check_branch
    %10 = sbr.rel (0) target = $region5
  $region4: #{gpt_forward.13} parent=0 // pred_region
    _
  $region5: #{gpt_forward.13} parent=0 // pred_fallthru
    _
  // Predicated region
  $region6: #{gpt_forward.13} parent=0 // pred_check
    _
  $region7: #{gpt_forward.13} parent=0 // pred_check_branch
    %12 = sbr.rel (0) target = $region9
  $region8: #{gpt_forward.13} parent=0 // pred_region
    _
  $region9: #{gpt_forward.13} parent=0 // pred_fallthru
    _
  // Predicated region
  $region10: #{gpt_forward.13} parent=0 // pred_check
    _
  $region11: #{gpt_forward.13} parent=0 // pred_check_branch
    %14 = sbr.rel (0) target = $region13
  $region12: #{gpt_forward.13} parent=0 // pred_region
    _
  $region13: #{gpt_forward.13} parent=0 // pred_fallthru
    _
  // Predicated region
  $region14: #{gpt_forward.13} parent=0 // pred_check
    _
  $region15: #{gpt_forward.13} parent=0 // pred_check_branch
    %16 = sbr.rel (0) target = $region17
  $region16: #{gpt_forward.13} parent=0 // pred_region
    _
  $region17: #{gpt_forward.13} parent=0 // pred_fallthru
    _
  %p18 = scmp.eq.s32.totalorder 0, 0
  // Predicated region
  $region18: #{gpt_forward.13} parent=0 // pred_check
    %p19 = pneg %p18
  $region19: #{gpt_forward.13} parent=0 // pred_check_branch
    %21 = sbr.rel (%p19) target = $region21
  $region20: #{gpt_forward.13} parent=0 // pred_region
    %v22 = vld [vmem:[%s0] sm:$0xff]
    %v23 = vld [vmem:[%s0 + $0x8] sm:$0xff]
    %v24 = vld [vmem:[%s1] sm:$0x1]
    %v25 = vld [vmem:[%s2] sm:$0x1]
    %vm26 = vcmask 261120
    %v27 = vsel %vm26, %v22, 0.0
    %28 = vadd.xlane.f32.xlu0 %v27
    %v29 = vpop.xlane.xlu0 %28
    %v30 = vsel %vm26, %v23, 0.0
    %31 = vadd.xlane.f32.xlu0 %v30
    %v32 = vpop.xlane.xlu0 %31
    %v33 = vrcp.pop 32.0
    %v34 = vmul.f32 %v29, %v33
    %v35 = vmul.f32 %v32, %v33
    %v36 = vsub.f32 %v22, %v34
    %v37 = vsub.f32 %v23, %v35
    %v38 = vmul.f32 %v36, %v36
    %v39 = vmul.f32 %v37, %v37
    %v40 = vsel %vm26, %v38, 0.0
    %41 = vadd.xlane.f32.xlu0 %v40
    %v42 = vpop.xlane.xlu0 %41
    %v43 = vsel %vm26, %v39, 0.0
    %44 = vadd.xlane.f32.xlu0 %v43
    %v45 = vpop.xlane.xlu0 %44
    %v46 = vmul.f32 %v42, %v33
    %v47 = vmul.f32 %v45, %v33
    %v48 = vadd.f32 %v46, 1e-05
    %v49 = vadd.f32 %v47, 1e-05
    %v50 = vrsqrt.pop %v48
    %v51 = vrsqrt.pop %v49
    %v52 = vmul.f32 %v36, %v50
    %v53 = vmul.f32 %v37, %v51
    %v55 = vlaneseq
    %v56 = vshrl.u32 %v55, 7
    %v57 = vsub.s32 0, %v56
    %v58 = vrot.slane %v24, %v57
    %v60 = vmul.f32 %v52, %v58
    %v61 = vmul.f32 %v53, %v58
    %v63 = vlaneseq
    %v64 = vshrl.u32 %v63, 7
    %v65 = vsub.s32 0, %v64
    %v66 = vrot.slane %v25, %v65
    %v68 = vadd.f32 %v60, %v66
    %v69 = vadd.f32 %v61, %v66
    %v70 = vpack.c.bf16 %v69, %v68
    %71 = vst.msk [vmem:[#allocation2] sm:$0xff] %vm26, %v70
  $region21: #{gpt_forward.13} parent=0 // pred_fallthru
    _
  %v72 = vld [vmem:[#allocation2] sm:$0xff]
  %v73 = vld [vmem:[%s3] sm:$0xf]
  %v74 = vld [vmem:[%s3 + $0x4] sm:$0xf]
  %v75 = vld [vmem:[%s3 + $0x8] sm:$0xf]
  %v76 = vld [vmem:[%s3 + $0xc] sm:$0xf]
  %v77 = vld [vmem:[%s3 + $0x10] sm:$0xf]
  %v78 = vld [vmem:[%s3 + $0x14] sm:$0xf]
  %v79 = vld [vmem:[%s3 + $0x18] sm:$0xf]
  %v80 = vld [vmem:[%s3 + $0x1c] sm:$0xf]
  %v81 = vld [vmem:[%s3 + $0x20] sm:$0xf]
  %v82 = vld [vmem:[%s3 + $0x24] sm:$0xf]
  %v83 = vld [vmem:[%s3 + $0x28] sm:$0xf]
  %v84 = vld [vmem:[%s3 + $0x2c] sm:$0xf]
  %v85 = vld [vmem:[%s3 + $0x30] sm:$0xf]
  %v86 = vld [vmem:[%s3 + $0x34] sm:$0xf]
  %v87 = vld [vmem:[%s3 + $0x38] sm:$0xf]
  %v88 = vld [vmem:[%s3 + $0x3c] sm:$0xf]
  %v105 = vunpack.c.l.b16 %v73
  %v106 = vunpack.c.l.b16 %v74
  %v107 = vunpack.c.l.b16 %v75
  %v108 = vunpack.c.l.b16 %v76
  %v109 = vunpack.c.l.b16 %v77
  %v110 = vunpack.c.l.b16 %v78
  %v111 = vunpack.c.l.b16 %v79
  %v112 = vunpack.c.l.b16 %v80
  %v113 = vunpack.c.l.b16 %v81
  %v114 = vunpack.c.l.b16 %v82
  %v115 = vunpack.c.l.b16 %v83
  %v116 = vunpack.c.l.b16 %v84
  %v117 = vunpack.c.l.b16 %v85
  %v118 = vunpack.c.l.b16 %v86
  %v119 = vunpack.c.l.b16 %v87
  %v120 = vunpack.c.l.b16 %v88
  %v121 = vpack.c.b16 %v106, %v105
  %v122 = vpack.c.b16 %v108, %v107
  %v123 = vpack.c.b16 %v110, %v109
  %v124 = vpack.c.b16 %v112, %v111
  %v125 = vpack.c.b16 %v114, %v113
  %v126 = vpack.c.b16 %v116, %v115
  %v127 = vpack.c.b16 %v118, %v117
  %v128 = vpack.c.b16 %v120, %v119
  %vm129 = vcmask 261120
  %v131 = vsel %vm129, %v72, 0
  %v134 = vsel %vm129, %v121, 0
  %v137 = vsel %vm129, %v122, 0
  %v140 = vsel %vm129, %v123, 0
  %v143 = vsel %vm129, %v124, 0
  %v146 = vsel %vm129, %v125, 0
  %v149 = vsel %vm129, %v126, 0
  %v152 = vsel %vm129, %v127, 0
  %v155 = vsel %vm129, %v128, 0
  %157 = vmatprep.subr.bf16.mxu0 0
  %158 = vmatpush1.bf16.xpose.msra.mxu0 %v134
  %159 = vmatprep.subr.bf16.mxu0 0
  %160 = vmatpush1.bf16.xpose.msra.mxu0 %v137
  %161 = vmatprep.subr.bf16.mxu0 0
  %162 = vmatpush1.bf16.xpose.msra.mxu0 %v140
  %163 = vmatprep.subr.bf16.mxu0 0
  %164 = vmatpush1.bf16.xpose.msra.mxu0 %v143
  %165 = vmatprep.subr.bf16.mxu0 0
  %166 = vmatpush1.bf16.xpose.msra.mxu0 %v146
  %167 = vmatprep.subr.bf16.mxu0 0
  %168 = vmatpush1.bf16.xpose.msra.mxu0 %v149
  %169 = vmatprep.subr.bf16.mxu0 0
  %170 = vmatpush1.bf16.xpose.msra.mxu0 %v152
  %171 = vmatprep.subr.bf16.mxu0 0
  %172 = vmatpush1.bf16.xpose.msra.mxu0 %v155
  %173 = vmatprep.subr.bf16.mxu0 0
  %174 = vmatpush1.bf16.xpose.msra.mxu0 0
  %175 = vmatprep.subr.bf16.mxu0 0
  %176 = vmatpush1.bf16.xpose.msra.mxu0 0
  %177 = vmatprep.subr.bf16.mxu0 0
  %178 = vmatpush1.bf16.xpose.msra.mxu0 0
  %179 = vmatprep.subr.bf16.mxu0 0
  %180 = vmatpush1.bf16.xpose.msra.mxu0 0
  %181 = vmatprep.subr.bf16.mxu0 0
  %182 = vmatpush1.bf16.xpose.msra.mxu0 0
  %183 = vmatprep.subr.bf16.mxu0 0
  %184 = vmatpush1.bf16.xpose.msra.mxu0 0
  %185 = vmatprep.subr.bf16.mxu0 0
  %186 = vmatpush1.bf16.xpose.msra.mxu0 0
  %187 = vmatprep.subr.bf16.mxu0 0
  %188 = vmatpush1.bf16.xpose.msra.mxu0 0
  %189 = vmatprep.mubr.bf16.mxu0 0
  %190 = vmatmul.mubr.bf16.gmra.mrb[0].mxu0 %v131
  %v191 = vpop.f32.mrb[0].mxu0
  %v192 = vadd.f32 0.0, %v191
  %v193 = vpop.f32.mrb[0].mxu0
  %v194 = vpop.f32.mrb[0].mxu0
  %v195 = vadd.f32 0.0, %v194
  %v196 = vpop.f32.mrb[0].mxu0
  %197 = vdwg.mxu0
  %198 = vst [vmem:[%s4] sm:$0xff] %v192
  %199 = vst [vmem:[%s4 + $0x8] sm:$0xff] %v195
  // Predicated region
  $region22: #{gpt_forward.13} parent=0 // pred_check
    _
  $region23: #{gpt_forward.13} parent=0 // pred_check_branch
    %201 = sbr.rel (0) target = $region25
  $region24: #{gpt_forward.13} parent=0 // pred_region
    _
  $region25: #{gpt_forward.13} parent=0 // pred_fallthru
    _
  // Predicated region
  $region26: #{gpt_forward.13} parent=0 // pred_check
    _
  $region27: #{gpt_forward.13} parent=0 // pred_check_branch
    %203 = sbr.rel (0) target = $region29
  $region28: #{gpt_forward.13} parent=0 // pred_region
    _
  $region29: #{gpt_forward.13} parent=0 // pred_fallthru
    _

// kernel: gpt_forward.9
$region0: #{gpt_forward.9}
  #allocation0 [shape = 'u32[]', space=smem, size = 0x4, offset = 0x4, fixed_abs, tag = 'smem constant byte address 0x4 - core index']
  #allocation1 [shape = 'u32[144,128]{1,0:T(1,128)}', space=vmem, size = 0x12000, scoped, tag = 'internal scratch']
  %s0 = inlined_call_operand.vmem [shape: f32[16,32], index: 0, kind: input, shape index: {}]
  %s1 = inlined_call_operand.vmem [shape: bf16[16,32], index: 1, kind: input, shape index: {}]
  %s2 = inlined_call_operand.vmem [shape: bf16[32,32], index: 2, kind: input, shape index: {}]
  %s3 = inlined_call_operand.vmem [shape: f32[1,32], index: 3, kind: input, shape index: {}]
  %s4 = inlined_call_operand.vmem [shape: f32[1,32], index: 4, kind: input, shape index: {}]
  %s5 = inlined_call_operand.vmem [shape: f32[1,32], index: 5, kind: input, shape index: {}]
  %s6 = inlined_call_operand.vmem [shape: bf16[32,128], index: 6, kind: input, shape index: {}]
  %s7 = inlined_call_operand.vmem [shape: f32[1,128], index: 7, kind: input, shape index: {}]
  %s8 = inlined_call_operand.vmem [shape: bf16[128,32], index: 8, kind: input, shape index: {}]
  %s9 = inlined_call_operand.vmem [shape: f32[1,32], index: 9, kind: input, shape index: {}]
  %s10 = inlined_call_operand.vmem [shape: f32[16,32], index: 10, kind: output, shape index: {}]
  %s11 = sld [smem:[#allocation0]]
  $region50: #{gpt_forward.9} parent=0
    _
  %s13 = ssub.s32 1, %s11
  %s14 = scalar_select 0, %s13, %s11
  // Predicated region
  $region2: #{gpt_forward.9} parent=0 // pred_check
    _
  $region3: #{gpt_forward.9} parent=0 // pred_check_branch
    %16 = sbr.rel (0) target = $region5
  $region4: #{gpt_forward.9} parent=0 // pred_region
    _
  $region5: #{gpt_forward.9} parent=0 // pred_fallthru
    _
  // Predicated region
  $region6: #{gpt_forward.9} parent=0 // pred_check
    _
  $region7: #{gpt_forward.9} parent=0 // pred_check_branch
    %18 = sbr.rel (0) target = $region9
  $region8: #{gpt_forward.9} parent=0 // pred_region
    _
  $region9: #{gpt_forward.9} parent=0 // pred_fallthru
    _
  // Predicated region
  $region10: #{gpt_forward.9} parent=0 // pred_check
    _
  $region11: #{gpt_forward.9} parent=0 // pred_check_branch
    %20 = sbr.rel (0) target = $region13
  $region12: #{gpt_forward.9} parent=0 // pred_region
    _
  $region13: #{gpt_forward.9} parent=0 // pred_fallthru
    _
  // Predicated region
  $region14: #{gpt_forward.9} parent=0 // pred_check
    _
  $region15: #{gpt_forward.9} parent=0 // pred_check_branch
    %22 = sbr.rel (0) target = $region17
  $region16: #{gpt_forward.9} parent=0 // pred_region
    _
  $region17: #{gpt_forward.9} parent=0 // pred_fallthru
    _
  // Predicated region
  $region18: #{gpt_forward.9} parent=0 // pred_check
    _
  $region19: #{gpt_forward.9} parent=0 // pred_check_branch
    %24 = sbr.rel (0) target = $region21
  $region20: #{gpt_forward.9} parent=0 // pred_region
    _
  $region21: #{gpt_forward.9} parent=0 // pred_fallthru
    _
  // Predicated region
  $region22: #{gpt_forward.9} parent=0 // pred_check
    _
  $region23: #{gpt_forward.9} parent=0 // pred_check_branch
    %26 = sbr.rel (0) target = $region25
  $region24: #{gpt_forward.9} parent=0 // pred_region
    _
  $region25: #{gpt_forward.9} parent=0 // pred_fallthru
    _
  // Predicated region
  $region26: #{gpt_forward.9} parent=0 // pred_check
    _
  $region27: #{gpt_forward.9} parent=0 // pred_check_branch
    %28 = sbr.rel (0) target = $region29
  $region28: #{gpt_forward.9} parent=0 // pred_region
    _
  $region29: #{gpt_forward.9} parent=0 // pred_fallthru
    _
  // Predicated region
  $region30: #{gpt_forward.9} parent=0 // pred_check
    _
  $region31: #{gpt_forward.9} parent=0 // pred_check_branch
    %30 = sbr.rel (0) target = $region33
  $region32: #{gpt_forward.9} parent=0 // pred_region
    _
  $region33: #{gpt_forward.9} parent=0 // pred_fallthru
    _
  // Predicated region
  $region34: #{gpt_forward.9} parent=0 // pred_check
    _
  $region35: #{gpt_forward.9} parent=0 // pred_check_branch
    %32 = sbr.rel (0) target = $region37
  $region36: #{gpt_forward.9} parent=0 // pred_region
    _
  $region37: #{gpt_forward.9} parent=0 // pred_fallthru
    _
  // Predicated region
  $region38: #{gpt_forward.9} parent=0 // pred_check
    _
  $region39: #{gpt_forward.9} parent=0 // pred_check_branch
    %34 = sbr.rel (0) target = $region41
  $region40: #{gpt_forward.9} parent=0 // pred_region
    _
  $region41: #{gpt_forward.9} parent=0 // pred_fallthru
    _
  %v36 = vld [vmem:[%s0] sm:$0xff]
  %v37 = vld [vmem:[%s0 + $0x8] sm:$0xff]
  %v38 = vld [vmem:[%s1] sm:$0xf]
  %v39 = vld [vmem:[%s1 + $0x4] sm:$0xf]
  %v40 = vld [vmem:[%s2] sm:$0xf]
  %v41 = vld [vmem:[%s2 + $0x4] sm:$0xf]
  %v42 = vld [vmem:[%s2 + $0x8] sm:$0xf]
  %v43 = vld [vmem:[%s2 + $0xc] sm:$0xf]
  %v46 = vunpack.c.l.b16 %v38
  %v47 = vunpack.c.l.b16 %v39
  %v48 = vpack.c.b16 %v47, %v46
  %v53 = vunpack.c.l.b16 %v40
  %v54 = vunpack.c.l.b16 %v41
  %v55 = vunpack.c.l.b16 %v42
  %v56 = vunpack.c.l.b16 %v43
  %v57 = vpack.c.b16 %v54, %v53
  %v58 = vpack.c.b16 %v56, %v55
  %vm61 = vcmask 261120
  %v63 = vsel %vm61, %v48, 0
  %65 = vmatprep.subr.bf16.mxu0 0
  %66 = vmatpush1.bf16.msra.mxu0 %v57
  %67 = vmatprep.subr.bf16.mxu0 0
  %68 = vmatpush1.bf16.msra.mxu0 %v58
  %69 = vmatprep.subr.bf16.mxu0 0
  %70 = vmatpush1.bf16.msra.mxu0 0
  %71 = vmatprep.subr.bf16.mxu0 0
  %72 = vmatpush1.bf16.msra.mxu0 0
  %73 = vmatprep.subr.bf16.mxu0 0
  %74 = vmatpush1.bf16.msra.mxu0 0
  %75 = vmatprep.subr.bf16.mxu0 0
  %76 = vmatpush1.bf16.msra.mxu0 0
  %77 = vmatprep.subr.bf16.mxu0 0
  %78 = vmatpush1.bf16.msra.mxu0 0
  %79 = vmatprep.subr.bf16.mxu0 0
  %80 = vmatpush1.bf16.msra.mxu0 0
  %81 = vmatprep.subr.bf16.mxu0 0
  %82 = vmatpush1.bf16.msra.mxu0 0
  %83 = vmatprep.subr.bf16.mxu0 0
  %84 = vmatpush1.bf16.msra.mxu0 0
  %85 = vmatprep.subr.bf16.mxu0 0
  %86 = vmatpush1.bf16.msra.mxu0 0
  %87 = vmatprep.subr.bf16.mxu0 0
  %88 = vmatpush1.bf16.msra.mxu0 0
  %89 = vmatprep.subr.bf16.mxu0 0
  %90 = vmatpush1.bf16.msra.mxu0 0
  %91 = vmatprep.subr.bf16.mxu0 0
  %92 = vmatpush1.bf16.msra.mxu0 0
  %93 = vmatprep.subr.bf16.mxu0 0
  %94 = vmatpush1.bf16.msra.mxu0 0
  %95 = vmatprep.subr.bf16.mxu0 0
  %96 = vmatpush1.bf16.msra.mxu0 0
  %97 = vmatprep.mubr.bf16.mxu0 0
  %98 = vmatmul.mubr.bf16.gmra.mrb[0].mxu0 %v63
  %v99 = vpop.f32.mrb[0].mxu0
  %v100 = vadd.f32 0.0, %v99
  %v101 = vpop.f32.mrb[0].mxu0
  %v102 = vpop.f32.mrb[0].mxu0
  %v103 = vadd.f32 0.0, %v102
  %v104 = vpop.f32.mrb[0].mxu0
  %105 = vdwg.mxu0
  %v106 = vadd.f32 %v36, %v100
  %v107 = vadd.f32 %v37, %v103
  %v108 = vld [vmem:[%s3] sm:$0x1]
  %v110 = vlaneseq
  %v111 = vshrl.u32 %v110, 7
  %v112 = vsub.s32 0, %v111
  %v113 = vrot.slane %v108, %v112
  %v115 = vadd.f32 %v106, %v113
  %v116 = vadd.f32 %v107, %v113
  %v117 = vld [vmem:[%s4] sm:$0x1]
  %v118 = vld [vmem:[%s5] sm:$0x1]
  %v119 = vsel %vm61, %v115, 0.0
  %120 = vadd.xlane.f32.xlu0 %v119
  %v121 = vpop.xlane.xlu0 %120
  %v122 = vsel %vm61, %v116, 0.0
  %123 = vadd.xlane.f32.xlu0 %v122
  %v124 = vpop.xlane.xlu0 %123
  %v125 = vrcp.pop 32.0
  %v126 = vmul.f32 %v121, %v125
  %v127 = vmul.f32 %v124, %v125
  %v128 = vsub.f32 %v115, %v126
  %v129 = vsub.f32 %v116, %v127
  %v130 = vmul.f32 %v128, %v128
  %v131 = vmul.f32 %v129, %v129
  %v132 = vsel %vm61, %v130, 0.0
  %133 = vadd.xlane.f32.xlu0 %v132
  %v134 = vpop.xlane.xlu0 %133
  %v135 = vsel %vm61, %v131, 0.0
  %136 = vadd.xlane.f32.xlu0 %v135
  %v137 = vpop.xlane.xlu0 %136
  %v138 = vmul.f32 %v134, %v125
  %v139 = vmul.f32 %v137, %v125
  %v140 = vadd.f32 %v138, 1e-05
  %v141 = vadd.f32 %v139, 1e-05
  %v142 = vrsqrt.pop %v140
  %v143 = vrsqrt.pop %v141
  %v144 = vmul.f32 %v128, %v142
  %v145 = vmul.f32 %v129, %v143
  %v147 = vlaneseq
  %v148 = vshrl.u32 %v147, 7
  %v149 = vsub.s32 0, %v148
  %v150 = vrot.slane %v117, %v149
  %v152 = vmul.f32 %v144, %v150
  %v153 = vmul.f32 %v145, %v150
  %v155 = vlaneseq
  %v156 = vshrl.u32 %v155, 7
  %v157 = vsub.s32 0, %v156
  %v158 = vrot.slane %v118, %v157
  %v160 = vadd.f32 %v152, %v158
  %v161 = vadd.f32 %v153, %v158
  %v162 = vpack.c.bf16 %v161, %v160
  %v163 = vld [vmem:[%s6] sm:$0xf]
  %v164 = vld [vmem:[%s6 + $0x4] sm:$0xf]
  %v165 = vld [vmem:[%s6 + $0x8] sm:$0xf]
  %v166 = vld [vmem:[%s6 + $0xc] sm:$0xf]
  %v167 = vld [vmem:[%s7] sm:$0x1]
  %v169 = vlaneseq
  %v170 = vshrl.u32 %v169, 7
  %v171 = vsub.s32 0, %v170
  %v172 = vrot.slane %v167, %v171
  %v178 = vunpack.c.l.b16 %v163
  %v179 = vunpack.c.l.b16 %v164
  %v180 = vunpack.c.l.b16 %v165
  %v181 = vunpack.c.l.b16 %v166
  %v182 = vpack.c.b16 %v179, %v178
  %v183 = vpack.c.b16 %v181, %v180
  %v187 = vsel %vm61, %v162, 0
  %189 = vmatprep.subr.bf16.mxu0 0
  %190 = vmatpush1.bf16.msra.mxu0 %v182
  %191 = vmatprep.subr.bf16.mxu0 0
  %192 = vmatpush1.bf16.msra.mxu0 %v183
  %193 = vmatprep.subr.bf16.mxu0 0
  %194 = vmatpush1.bf16.msra.mxu0 0
  %195 = vmatprep.subr.bf16.mxu0 0
  %196 = vmatpush1.bf16.msra.mxu0 0
  %197 = vmatprep.subr.bf16.mxu0 0
  %198 = vmatpush1.bf16.msra.mxu0 0
  %199 = vmatprep.subr.bf16.mxu0 0
  %200 = vmatpush1.bf16.msra.mxu0 0
  %201 = vmatprep.subr.bf16.mxu0 0
  %202 = vmatpush1.bf16.msra.mxu0 0
  %203 = vmatprep.subr.bf16.mxu0 0
  %204 = vmatpush1.bf16.msra.mxu0 0
  %205 = vmatprep.subr.bf16.mxu0 0
  %206 = vmatpush1.bf16.msra.mxu0 0
  %207 = vmatprep.subr.bf16.mxu0 0
  %208 = vmatpush1.bf16.msra.mxu0 0
  %209 = vmatprep.subr.bf16.mxu0 0
  %210 = vmatpush1.bf16.msra.mxu0 0
  %211 = vmatprep.subr.bf16.mxu0 0
  %212 = vmatpush1.bf16.msra.mxu0 0
  %213 = vmatprep.subr.bf16.mxu0 0
  %214 = vmatpush1.bf16.msra.mxu0 0
  %215 = vmatprep.subr.bf16.mxu0 0
  %216 = vmatpush1.bf16.msra.mxu0 0
  %217 = vmatprep.subr.bf16.mxu0 0
  %218 = vmatpush1.bf16.msra.mxu0 0
  %219 = vmatprep.subr.bf16.mxu0 0
  %220 = vmatpush1.bf16.msra.mxu0 0
  %221 = vmatprep.mubr.bf16.mxu0 0
  %222 = vmatmul.mubr.bf16.gmra.mrb[0].mxu0 %v187
  %v223 = vpop.f32.mrb[0].mxu0
  %v224 = vadd.f32 %v172, %v223
  %v225 = vpop.f32.mrb[0].mxu0
  %v226 = vpop.f32.mrb[0].mxu0
  %v227 = vadd.f32 %v172, %v226
  %v228 = vpop.f32.mrb[0].mxu0
  %229 = vdwg.mxu0
  %v230 = vmul.f32 %v224, 0.5
  %v231 = vmul.f32 %v227, 0.5
  %v232 = vmul.f32 %v224, 0.044715
  %v233 = vmul.f32 %v227, 0.044715
  %v234 = vmul.f32 %v232, %v224
  %v235 = vmul.f32 %v233, %v227
  %v236 = vmul.f32 %v234, %v224
  %v237 = vmul.f32 %v235, %v227
  %v238 = vadd.f32 %v224, %v236
  %v239 = vadd.f32 %v227, %v237
  %v240 = vmul.f32 %v238, 0.7978846
  %v241 = vmul.f32 %v239, 0.7978846
  %v242 = vtanh.pop %v240
  %v243 = vtanh.pop %v241
  %v244 = vadd.f32 %v242, 1.0
  %v245 = vadd.f32 %v243, 1.0
  %v246 = vmul.f32 %v230, %v244
  %v247 = vmul.f32 %v231, %v245
  %v248 = vpack.c.bf16 %v247, %v246
  %v249 = vld [vmem:[%s8] sm:$0xf]
  %v250 = vld [vmem:[%s8 + $0x4] sm:$0xf]
  %v251 = vld [vmem:[%s8 + $0x8] sm:$0xf]
  %v252 = vld [vmem:[%s8 + $0xc] sm:$0xf]
  %v253 = vld [vmem:[%s8 + $0x10] sm:$0xf]
  %v254 = vld [vmem:[%s8 + $0x14] sm:$0xf]
  %v255 = vld [vmem:[%s8 + $0x18] sm:$0xf]
  %v256 = vld [vmem:[%s8 + $0x1c] sm:$0xf]
  %v257 = vld [vmem:[%s8 + $0x20] sm:$0xf]
  %v258 = vld [vmem:[%s8 + $0x24] sm:$0xf]
  %v259 = vld [vmem:[%s8 + $0x28] sm:$0xf]
  %v260 = vld [vmem:[%s8 + $0x2c] sm:$0xf]
  %v261 = vld [vmem:[%s8 + $0x30] sm:$0xf]
  %v262 = vld [vmem:[%s8 + $0x34] sm:$0xf]
  %v263 = vld [vmem:[%s8 + $0x38] sm:$0xf]
  %v264 = vld [vmem:[%s8 + $0x3c] sm:$0xf]
  %v281 = vunpack.c.l.b16 %v249
  %v282 = vunpack.c.l.b16 %v250
  %v283 = vunpack.c.l.b16 %v251
  %v284 = vunpack.c.l.b16 %v252
  %v285 = vunpack.c.l.b16 %v253
  %v286 = vunpack.c.l.b16 %v254
  %v287 = vunpack.c.l.b16 %v255
  %v288 = vunpack.c.l.b16 %v256
  %v289 = vunpack.c.l.b16 %v257
  %v290 = vunpack.c.l.b16 %v258
  %v291 = vunpack.c.l.b16 %v259
  %v292 = vunpack.c.l.b16 %v260
  %v293 = vunpack.c.l.b16 %v261
  %v294 = vunpack.c.l.b16 %v262
  %v295 = vunpack.c.l.b16 %v263
  %v296 = vunpack.c.l.b16 %v264
  %v297 = vpack.c.b16 %v282, %v281
  %v298 = vpack.c.b16 %v284, %v283
  %v299 = vpack.c.b16 %v286, %v285
  %v300 = vpack.c.b16 %v288, %v287
  %v301 = vpack.c.b16 %v290, %v289
  %v302 = vpack.c.b16 %v292, %v291
  %v303 = vpack.c.b16 %v294, %v293
  %v304 = vpack.c.b16 %v296, %v295
  %313 = vmatprep.subr.bf16.mxu0 0
  %314 = vmatpush1.bf16.msra.mxu0 %v297
  %315 = vmatprep.subr.bf16.mxu0 0
  %316 = vmatpush1.bf16.msra.mxu0 %v298
  %317 = vmatprep.subr.bf16.mxu0 0
  %318 = vmatpush1.bf16.msra.mxu0 %v299
  %319 = vmatprep.subr.bf16.mxu0 0
  %320 = vmatpush1.bf16.msra.mxu0 %v300
  %321 = vmatprep.subr.bf16.mxu0 0
  %322 = vmatpush1.bf16.msra.mxu0 %v301
  %323 = vmatprep.subr.bf16.mxu0 0
  %324 = vmatpush1.bf16.msra.mxu0 %v302
  %325 = vmatprep.subr.bf16.mxu0 0
  %326 = vmatpush1.bf16.msra.mxu0 %v303
  %327 = vmatprep.subr.bf16.mxu0 0
  %328 = vmatpush1.bf16.msra.mxu0 %v304
  %329 = vmatprep.subr.bf16.mxu0 0
  %330 = vmatpush1.bf16.msra.mxu0 0
  %331 = vmatprep.subr.bf16.mxu0 0
  %332 = vmatpush1.bf16.msra.mxu0 0
  %333 = vmatprep.subr.bf16.mxu0 0
  %334 = vmatpush1.bf16.msra.mxu0 0
  %335 = vmatprep.subr.bf16.mxu0 0
  %336 = vmatpush1.bf16.msra.mxu0 0
  %337 = vmatprep.subr.bf16.mxu0 0
  %338 = vmatpush1.bf16.msra.mxu0 0
  %339 = vmatprep.subr.bf16.mxu0 0
  %340 = vmatpush1.bf16.msra.mxu0 0
  %341 = vmatprep.subr.bf16.mxu0 0
  %342 = vmatpush1.bf16.msra.mxu0 0
  %343 = vmatprep.subr.bf16.mxu0 0
  %344 = vmatpush1.bf16.msra.mxu0 0
  %345 = vmatprep.mubr.bf16.mxu0 0
  %346 = vmatmul.mubr.bf16.gmra.mrb[0].mxu0 %v248
  %v347 = vpop.f32.mrb[0].mxu0
  %v348 = vadd.f32 0.0, %v347
  %v349 = vpop.f32.mrb[0].mxu0
  %v350 = vpop.f32.mrb[0].mxu0
  %v351 = vadd.f32 0.0, %v350
  %v352 = vpop.f32.mrb[0].mxu0
  %353 = vdwg.mxu0
  %v354 = vadd.f32 %v115, %v348
  %v355 = vadd.f32 %v116, %v351
  %v356 = vld [vmem:[%s9] sm:$0x1]
  %v358 = vlaneseq
  %v359 = vshrl.u32 %v358, 7
  %v360 = vsub.s32 0, %v359
  %v361 = vrot.slane %v356, %v360
  %v363 = vadd.f32 %v354, %v361
  %v364 = vadd.f32 %v355, %v361
  %365 = vst.msk [vmem:[%s10] sm:$0xff] %vm61, %v363
  %366 = vst.msk [vmem:[%s10 + $0x8] sm:$0xff] %vm61, %v364
  // Predicated region
  $region42: #{gpt_forward.9} parent=0 // pred_check
    _
  $region43: #{gpt_forward.9} parent=0 // pred_check_branch
    %368 = sbr.rel (0) target = $region45
  $region44: #{gpt_forward.9} parent=0 // pred_region
    _
  $region45: #{gpt_forward.9} parent=0 // pred_fallthru
    _
  // Predicated region
  $region46: #{gpt_forward.9} parent=0 // pred_check
    _
  $region47: #{gpt_forward.9} parent=0 // pred_check_branch
    %370 = sbr.rel (0) target = $region49
  $region48: #{gpt_forward.9} parent=0 // pred_region
    _
  $region49: #{gpt_forward.9} parent=0 // pred_fallthru
    _

// kernel: gpt_forward.8
$region0: #{gpt_forward.8}
  #allocation0 [shape = 'u32[]', space=smem, size = 0x4, offset = 0x4, fixed_abs, tag = 'smem constant byte address 0x4 - core index']
  #allocation1 [shape = 'u32[144,128]{1,0:T(1,128)}', space=vmem, size = 0x12000, scoped, tag = 'internal scratch']
  %s0 = inlined_call_operand.vmem [shape: bf16[2,8,3,4,8], index: 0, kind: input, shape index: {}, may-alias: {0,1,2}]
  %s1 = inlined_call_operand.vmem [shape: bf16[2,8,3,4,8], index: 1, kind: input, shape index: {}, may-alias: {0,1,2}]
  %s2 = inlined_call_operand.vmem [shape: bf16[2,8,3,4,8], index: 2, kind: input, shape index: {}, may-alias: {0,1,2}]
  %s3 = inlined_call_operand.vmem [shape: bf16[2,8,32], index: 3, kind: output, shape index: {}]
  %s4 = sld [smem:[#allocation0]]
  $region175: #{gpt_forward.8} parent=0
    _
  %s6 = ssub.s32 1, %s4
  %s7 = scalar_select 0, %s6, %s4
  $region1: #{gpt_forward.8} parent=0
    #allocation2 [shape = 'u8[16384]{0}', space=vmem, size = 0x4000, scoped, tag = 'input window, operand 0']
    #allocation3 [shape = 'u8[16384]{0}', space=vmem, size = 0x4000, scoped, tag = 'input window, operand 1']
    #allocation4 [shape = 'u8[16384]{0}', space=vmem, size = 0x4000, scoped, tag = 'input window, operand 2']
    loop: start=0, step=1, limit=4
    $region2: #{gpt_forward.8} parent=1 // loop_pre_header
      _
    $region3: #{gpt_forward.8} parent=1 // loop_header
      %s9 = sphi 0, %s13
      %p10 = scmp.ge.s32.totalorder %s9, 4
      %s16 = sphi 0, %s28
      %s17 = sphi 0, %s24
      %s18 = sphi 0, %s16
      %s19 = sphi 0, %s17
      %s20 = sphi 0, %s18
      %s21 = sphi 0, %s19
      %s33 = sphi 0, %s35
      %s36 = sphi 0, %s33
      %s37 = sphi 0, %s36
      %s53 = sphi 0, %s37
      %s59 = sphi 0, %s61
      %s62 = sphi 0, %s59
      %s63 = sphi 0, %s62
      %s79 = sphi 0, %s63
      %s85 = sphi 0, %s87
      %s88 = sphi 0, %s85
      %s89 = sphi 0, %s88
      %s105 = sphi 0, %s89
      %s113 = sphi 0, %s115
      %s116 = sphi 0, %s113
      %s117 = sphi 0, %s116
      %s133 = sphi 0, %s117
    $region4: #{gpt_forward.8} parent=1 // loop_header_branch
      %12 = sbr.rel (%p10) target = $region8
    $region5: #{gpt_forward.8} parent=1 // loop_body
      %s14 = ssub.s32 %s9, 1
      %s15 = ssub.s32 %s9, 2
      %s22 = sadd.s32 1, %s17
      %p23 = scmp.ge.s32.totalorder %s22, 1
      %s24 = scalar_select %p23, 0, %s22
      %s25 = sadd.s32 1, %s16
      %s26 = scalar_select %p23, %s25, %s16
      %p27 = scmp.ge.s32.totalorder %s26, 2
      %s28 = scalar_select %p27, 0, %s26
      %s29 = ssub.s32 %s16, %s28
      %s30 = ssub.s32 %s17, %s24
      %s31 = sor.u32 %s29, %s30
      %p32 = scmp.eq.s32.totalorder %s31, 0
      %s34 = sadd.s32 %s33, 1
      %s35 = scalar_select %p32, %s33, %s34
      %p38 = pneg %p32
      %p39 = scmp.eq.s32.totalorder %s9, 1
      %p40 = por %p38, %p39
      %p41 = scmp.ne.s32.totalorder %s33, %s36
      %p42 = scmp.eq.s32.totalorder %s9, 0
      %p43 = por %p41, %p42
      %p44 = scmp.ne.s32.totalorder %s33, %s36
      %p45 = scmp.eq.s32.totalorder %s14, 1
      %p46 = por %p44, %p45
      %p47 = scmp.ne.s32.totalorder %s36, %s37
      %p48 = scmp.eq.s32.totalorder %s14, 0
      %p49 = por %p47, %p48
      %p50 = scmp.ne.s32.totalorder %s36, %s37
      %p51 = scmp.eq.s32.totalorder %s15, 1
      %p52 = por %p50, %p51
      %p54 = scmp.ne.s32.totalorder %s37, %s53
      %p55 = scmp.eq.s32.totalorder %s15, 0
      %p56 = por %p54, %p55
      %s57 = ssub.s32 %s16, %s28
      %p58 = scmp.eq.s32.totalorder %s57, 0
      %s60 = sadd.s32 %s59, 1
      %s61 = scalar_select %p58, %s59, %s60
      %p64 = pneg %p58
      %p65 = scmp.eq.s32.totalorder %s9, 1
      %p66 = por %p64, %p65
      %p67 = scmp.ne.s32.totalorder %s59, %s62
      %p68 = scmp.eq.s32.totalorder %s9, 0
      %p69 = por %p67, %p68
      %p70 = scmp.ne.s32.totalorder %s59, %s62
      %p71 = scmp.eq.s32.totalorder %s14, 1
      %p72 = por %p70, %p71
      %p73 = scmp.ne.s32.totalorder %s62, %s63
      %p74 = scmp.eq.s32.totalorder %s14, 0
      %p75 = por %p73, %p74
      %p76 = scmp.ne.s32.totalorder %s62, %s63
      %p77 = scmp.eq.s32.totalorder %s15, 1
      %p78 = por %p76, %p77
      %p80 = scmp.ne.s32.totalorder %s63, %s79
      %p81 = scmp.eq.s32.totalorder %s15, 0
      %p82 = por %p80, %p81
      %s83 = ssub.s32 %s16, %s28
      %p84 = scmp.eq.s32.totalorder %s83, 0
      %s86 = sadd.s32 %s85, 1
      %s87 = scalar_select %p84, %s85, %s86
      %p90 = pneg %p84
      %p91 = scmp.eq.s32.totalorder %s9, 1
      %p92 = por %p90, %p91
      %p93 = scmp.ne.s32.totalorder %s85, %s88
      %p94 = scmp.eq.s32.totalorder %s9, 0
      %p95 = por %p93, %p94
      %p96 = scmp.ne.s32.totalorder %s85, %s88
      %p97 = scmp.eq.s32.totalorder %s14, 1
      %p98 = por %p96, %p97
      %p99 = scmp.ne.s32.totalorder %s88, %s89
      %p100 = scmp.eq.s32.totalorder %s14, 0
      %p101 = por %p99, %p100
      %p102 = scmp.ne.s32.totalorder %s88, %s89
      %p103 = scmp.eq.s32.totalorder %s15, 1
      %p104 = por %p102, %p103
      %p106 = scmp.ne.s32.totalorder %s89, %s105
      %p107 = scmp.eq.s32.totalorder %s15, 0
      %p108 = por %p106, %p107
      %s109 = ssub.s32 %s16, %s28
      %s110 = ssub.s32 %s17, %s24
      %s111 = sor.u32 %s109, %s110
      %p112 = scmp.eq.s32.totalorder %s111, 0
      %s114 = sadd.s32 %s113, 1
      %s115 = scalar_select %p112, %s113, %s114
      %p118 = pneg %p112
      %p119 = scmp.eq.s32.totalorder %s9, 1
      %p120 = por %p118, %p119
      %p121 = scmp.ne.s32.totalorder %s113, %s116
      %p122 = scmp.eq.s32.totalorder %s9, 0
      %p123 = por %p121, %p122
      %p124 = scmp.ne.s32.totalorder %s113, %s116
      %p125 = scmp.eq.s32.totalorder %s14, 1
      %p126 = por %p124, %p125
      %p127 = scmp.ne.s32.totalorder %s116, %s117
      %p128 = scmp.eq.s32.totalorder %s14, 0
      %p129 = por %p127, %p128
      %p130 = scmp.ne.s32.totalorder %s116, %s117
      %p131 = scmp.eq.s32.totalorder %s15, 1
      %p132 = por %p130, %p131
      %p134 = scmp.ne.s32.totalorder %s117, %s133
      %p135 = scmp.eq.s32.totalorder %s15, 0
      %p136 = por %p134, %p135
      %p137 = scmp.le.s32.totalorder 1, %s9
      %p138 = scmp.lt.s32.totalorder %s9, 3
      %p139 = pnand %p137, %p138
      %p140 = pneg %p139
      // Predicated region
      $region9: #{gpt_forward.8} parent=5 // pred_check
        _
      $region10: #{gpt_forward.8} parent=5 // pred_check_branch
        %142 = sbr.rel (%p139) target = $region12
      $region11: #{gpt_forward.8} parent=5 // pred_region
        %s143 = ssub.s32 %s9, 1
      $region12: #{gpt_forward.8} parent=5 // pred_fallthru
        _
      %p144 = scmp.lt.s32.totalorder %s9, 2
      // Predicated region
      $region13: #{gpt_forward.8} parent=5 // pred_check
        %p145 = pneg %p144
      $region14: #{gpt_forward.8} parent=5 // pred_check_branch
        %147 = sbr.rel (%p145) target = $region16
      $region15: #{gpt_forward.8} parent=5 // pred_region
        // Predicated region
        $region17: #{gpt_forward.8} parent=15 // pred_check
          %p148 = pneg %p43
        $region18: #{gpt_forward.8} parent=15 // pred_check_branch
          %150 = sbr.rel (%p148) target = $region20
        $region19: #{gpt_forward.8} parent=15 // pred_region
          %s151 = sand.u32 %s33, 1
          %s152 = sand.u32 %s33, 1
          %s153 = smul.addr %s152, 16
          %s154 = scalar_lea.vmem [#allocation2], %s153
          %s155 = smul.u32 8, %s17
          %s156 = smul.addr %s155, 3
          %s157 = smul.addr %s16, 24
          %s158 = sadd.s32 %s156, %s157
          %s159 = smul.addr %s158, 2
          %s160 = scalar_lea.vmem %s0, %s159
          // Predicated region
          $region21: #{gpt_forward.8} parent=19 // pred_check
            _
          $region22: #{gpt_forward.8} parent=19 // pred_check_branch
            %162 = sbr.rel (0) target = $region24
          $region23: #{gpt_forward.8} parent=19 // pred_region
            // Predicated region
            $region25: #{gpt_forward.8} parent=23 // pred_check
              _
            $region26: #{gpt_forward.8} parent=23 // pred_check_branch
              %164 = sbr.rel target = $region28
            $region27: #{gpt_forward.8} parent=23 // pred_region
              // Predicated region
              $region40: #{gpt_forward.8} parent=27 // pred_check
                _
              $region41: #{gpt_forward.8} parent=27 // pred_check_branch
                %193 = sbr.rel (0) target = $region43
              $region42: #{gpt_forward.8} parent=27 // pred_region
                loop: start=0, step=1, limit=1
                $region44: #{gpt_forward.8} parent=42 // loop_pre_header
                  _
                $region45: #{gpt_forward.8} parent=42 // loop_header
                  %s195 = sphi 0, %s199
                  %p196 = scmp.ge.s32.totalorder %s195, 1
                  %s200 = sphi %s160, %s160
                  %s201 = sphi %s154, %s154
                $region46: #{gpt_forward.8} parent=42 // loop_header_branch
                  %198 = sbr.rel (%p196) target = $region50
                $region47: #{gpt_forward.8} parent=42 // loop_body
                  _
                $region48: #{gpt_forward.8} parent=42 // loop_footer
                  %s199 = sadd.s32 1, %s195
                $region49: #{gpt_forward.8} parent=42 // loop_footer_branch
                  %194 = sbr.rel target = $region45
                $region50: #{gpt_forward.8} parent=42 // loop_exit
                  _
                loop: start=0, step=1, limit=1
                $region51: #{gpt_forward.8} parent=42 // loop_pre_header
                  _
                $region52: #{gpt_forward.8} parent=42 // loop_header
                  %s204 = sphi 0, %s208
                  %p205 = scmp.ge.s32.totalorder %s204, 1
                  %s209 = sphi %s160, %s160
                  %s210 = sphi %s154, %s154
                $region53: #{gpt_forward.8} parent=42 // loop_header_branch
                  %207 = sbr.rel (%p205) target = $region57
                $region54: #{gpt_forward.8} parent=42 // loop_body
                  %v211 = vld [vmem:[%s209] sm:$0x3]
                  %212 = vst [vmem:[%s210] sm:$0x3] %v211
                  %v213 = vld [vmem:[%s209 + $0x6] sm:$0x3]
                  %214 = vst [vmem:[%s210 + $0x2] sm:$0x3] %v213
                  %v215 = vld [vmem:[%s209 + $0xc] sm:$0x3]
                  %216 = vst [vmem:[%s210 + $0x4] sm:$0x3] %v215
                  %v217 = vld [vmem:[%s209 + $0x12] sm:$0x3]
                  %218 = vst [vmem:[%s210 + $0x6] sm:$0x3] %v217
                  %v219 = vld [vmem:[%s209 + $0x18] sm:$0x3]
                  %220 = vst [vmem:[%s210 + $0x8] sm:$0x3] %v219
                  %v221 = vld [vmem:[%s209 + $0x1e] sm:$0x3]
                  %222 = vst [vmem:[%s210 + $0xa] sm:$0x3] %v221
                  %v223 = vld [vmem:[%s209 + $0x24] sm:$0x3]
                  %224 = vst [vmem:[%s210 + $0xc] sm:$0x3] %v223
                  %v225 = vld [vmem:[%s209 + $0x2a] sm:$0x3]
                  %226 = vst [vmem:[%s210 + $0xe] sm:$0x3] %v225
                $region55: #{gpt_forward.8} parent=42 // loop_footer
                  %s208 = sadd.s32 1, %s204
                $region56: #{gpt_forward.8} parent=42 // loop_footer_branch
                  %203 = sbr.rel target = $region52
                $region57: #{gpt_forward.8} parent=42 // loop_exit
                  _
              $region43: #{gpt_forward.8} parent=27 // pred_fallthru
                _
            $region28: #{gpt_forward.8} parent=23 // pred_fallthru
              _
            // Predicated region
            $region29: #{gpt_forward.8} parent=23 // pred_check
              _
            $region30: #{gpt_forward.8} parent=23 // pred_check_branch
              %166 = sbr.rel (0) target = $region32
            $region31: #{gpt_forward.8} parent=23 // pred_region
              loop: start=0, step=1, limit=1
              $region33: #{gpt_forward.8} parent=31 // loop_pre_header
                _
              $region34: #{gpt_forward.8} parent=31 // loop_header
                %s169 = sphi 0, %s173
                %p170 = scmp.ge.s32.totalorder %s169, 1
                %s174 = sphi %s160, %s160
                %s175 = sphi %s154, %s154
              $region35: #{gpt_forward.8} parent=31 // loop_header_branch
                %172 = sbr.rel (%p170) target = $region39
              $region36: #{gpt_forward.8} parent=31 // loop_body
                %v176 = vld [vmem:[%s174] sm:$0x3]
                %177 = vst [vmem:[%s175] sm:$0x3] %v176
                %v178 = vld [vmem:[%s174 + $0x6] sm:$0x3]
                %179 = vst [vmem:[%s175 + $0x2] sm:$0x3] %v178
                %v180 = vld [vmem:[%s174 + $0xc] sm:$0x3]
                %181 = vst [vmem:[%s175 + $0x4] sm:$0x3] %v180
                %v182 = vld [vmem:[%s174 + $0x12] sm:$0x3]
                %183 = vst [vmem:[%s175 + $0x6] sm:$0x3] %v182
                %v184 = vld [vmem:[%s174 + $0x18] sm:$0x3]
                %185 = vst [vmem:[%s175 + $0x8] sm:$0x3] %v184
                %v186 = vld [vmem:[%s174 + $0x1e] sm:$0x3]
                %187 = vst [vmem:[%s175 + $0xa] sm:$0x3] %v186
                %v188 = vld [vmem:[%s174 + $0x24] sm:$0x3]
                %189 = vst [vmem:[%s175 + $0xc] sm:$0x3] %v188
                %v190 = vld [vmem:[%s174 + $0x2a] sm:$0x3]
                %191 = vst [vmem:[%s175 + $0xe] sm:$0x3] %v190
              $region37: #{gpt_forward.8} parent=31 // loop_footer
                %s173 = sadd.s32 1, %s169
              $region38: #{gpt_forward.8} parent=31 // loop_footer_branch
                %168 = sbr.rel target = $region34
              $region39: #{gpt_forward.8} parent=31 // loop_exit
                _
            $region32: #{gpt_forward.8} parent=23 // pred_fallthru
              _
          $region24: #{gpt_forward.8} parent=19 // pred_fallthru
            _
          %227 = vnop
        $region20: #{gpt_forward.8} parent=15 // pred_fallthru
          _
        // Predicated region
        $region58: #{gpt_forward.8} parent=15 // pred_check
          %p228 = pneg %p69
        $region59: #{gpt_forward.8} parent=15 // pred_check_branch
          %230 = sbr.rel (%p228) target = $region61
        $region60: #{gpt_forward.8} parent=15 // pred_region
          %s231 = sand.u32 %s59, 1
          %s232 = sand.u32 %s59, 1
          %s233 = smul.addr %s232, 16
          %s234 = scalar_lea.vmem [#allocation3], %s233
          %s235 = smul.addr %s16, 24
          %s236 = sadd.s32 1, %s235
          %s237 = smul.addr %s236, 2
          %s238 = scalar_lea.vmem %s1, %s237
          // Predicated region
          $region62: #{gpt_forward.8} parent=60 // pred_check
            _
          $region63: #{gpt_forward.8} parent=60 // pred_check_branch
            %240 = sbr.rel (0) target = $region65
          $region64: #{gpt_forward.8} parent=60 // pred_region
            // Predicated region
            $region66: #{gpt_forward.8} parent=64 // pred_check
              _
            $region67: #{gpt_forward.8} parent=64 // pred_check_branch
              %242 = sbr.rel target = $region69
            $region68: #{gpt_forward.8} parent=64 // pred_region
              // Predicated region
              $region81: #{gpt_forward.8} parent=68 // pred_check
                _
              $region82: #{gpt_forward.8} parent=68 // pred_check_branch
                %271 = sbr.rel (0) target = $region84
              $region83: #{gpt_forward.8} parent=68 // pred_region
                loop: start=0, step=1, limit=1
                $region85: #{gpt_forward.8} parent=83 // loop_pre_header
                  _
                $region86: #{gpt_forward.8} parent=83 // loop_header
                  %s273 = sphi 0, %s277
                  %p274 = scmp.ge.s32.totalorder %s273, 1
                  %s278 = sphi %s238, %s238
                  %s279 = sphi %s234, %s234
                $region87: #{gpt_forward.8} parent=83 // loop_header_branch
                  %276 = sbr.rel (%p274) target = $region91
                $region88: #{gpt_forward.8} parent=83 // loop_body
                  _
                $region89: #{gpt_forward.8} parent=83 // loop_footer
                  %s277 = sadd.s32 1, %s273
                $region90: #{gpt_forward.8} parent=83 // loop_footer_branch
                  %272 = sbr.rel target = $region86
                $region91: #{gpt_forward.8} parent=83 // loop_exit
                  _
                loop: start=0, step=1, limit=1
                $region92: #{gpt_forward.8} parent=83 // loop_pre_header
                  _
                $region93: #{gpt_forward.8} parent=83 // loop_header
                  %s282 = sphi 0, %s286
                  %p283 = scmp.ge.s32.totalorder %s282, 1
                  %s287 = sphi %s238, %s238
                  %s288 = sphi %s234, %s234
                $region94: #{gpt_forward.8} parent=83 // loop_header_branch
                  %285 = sbr.rel (%p283) target = $region98
                $region95: #{gpt_forward.8} parent=83 // loop_body
                  %v289 = vld [vmem:[%s287] sm:$0x3]
                  %290 = vst [vmem:[%s288] sm:$0x3] %v289
                  %v291 = vld [vmem:[%s287 + $0x6] sm:$0x3]
                  %292 = vst [vmem:[%s288 + $0x2] sm:$0x3] %v291
                  %v293 = vld [vmem:[%s287 + $0xc] sm:$0x3]
                  %294 = vst [vmem:[%s288 + $0x4] sm:$0x3] %v293
                  %v295 = vld [vmem:[%s287 + $0x12] sm:$0x3]
                  %296 = vst [vmem:[%s288 + $0x6] sm:$0x3] %v295
                  %v297 = vld [vmem:[%s287 + $0x18] sm:$0x3]
                  %298 = vst [vmem:[%s288 + $0x8] sm:$0x3] %v297
                  %v299 = vld [vmem:[%s287 + $0x1e] sm:$0x3]
                  %300 = vst [vmem:[%s288 + $0xa] sm:$0x3] %v299
                  %v301 = vld [vmem:[%s287 + $0x24] sm:$0x3]
                  %302 = vst [vmem:[%s288 + $0xc] sm:$0x3] %v301
                  %v303 = vld [vmem:[%s287 + $0x2a] sm:$0x3]
                  %304 = vst [vmem:[%s288 + $0xe] sm:$0x3] %v303
                $region96: #{gpt_forward.8} parent=83 // loop_footer
                  %s286 = sadd.s32 1, %s282
                $region97: #{gpt_forward.8} parent=83 // loop_footer_branch
                  %281 = sbr.rel target = $region93
                $region98: #{gpt_forward.8} parent=83 // loop_exit
                  _
              $region84: #{gpt_forward.8} parent=68 // pred_fallthru
                _
            $region69: #{gpt_forward.8} parent=64 // pred_fallthru
              _
            // Predicated region
            $region70: #{gpt_forward.8} parent=64 // pred_check
              _
            $region71: #{gpt_forward.8} parent=64 // pred_check_branch
              %244 = sbr.rel (0) target = $region73
            $region72: #{gpt_forward.8} parent=64 // pred_region
              loop: start=0, step=1, limit=1
              $region74: #{gpt_forward.8} parent=72 // loop_pre_header
                _
              $region75: #{gpt_forward.8} parent=72 // loop_header
                %s247 = sphi 0, %s251
                %p248 = scmp.ge.s32.totalorder %s247, 1
                %s252 = sphi %s238, %s238
                %s253 = sphi %s234, %s234
              $region76: #{gpt_forward.8} parent=72 // loop_header_branch
                %250 = sbr.rel (%p248) target = $region80
              $region77: #{gpt_forward.8} parent=72 // loop_body
                %v254 = vld [vmem:[%s252] sm:$0x3]
                %255 = vst [vmem:[%s253] sm:$0x3] %v254
                %v256 = vld [vmem:[%s252 + $0x6] sm:$0x3]
                %257 = vst [vmem:[%s253 + $0x2] sm:$0x3] %v256
                %v258 = vld [vmem:[%s252 + $0xc] sm:$0x3]
                %259 = vst [vmem:[%s253 + $0x4] sm:$0x3] %v258
                %v260 = vld [vmem:[%s252 + $0x12] sm:$0x3]
                %261 = vst [vmem:[%s253 + $0x6] sm:$0x3] %v260
                %v262 = vld [vmem:[%s252 + $0x18] sm:$0x3]
                %263 = vst [vmem:[%s253 + $0x8] sm:$0x3] %v262
                %v264 = vld [vmem:[%s252 + $0x1e] sm:$0x3]
                %265 = vst [vmem:[%s253 + $0xa] sm:$0x3] %v264
                %v266 = vld [vmem:[%s252 + $0x24] sm:$0x3]
                %267 = vst [vmem:[%s253 + $0xc] sm:$0x3] %v266
                %v268 = vld [vmem:[%s252 + $0x2a] sm:$0x3]
                %269 = vst [vmem:[%s253 + $0xe] sm:$0x3] %v268
              $region78: #{gpt_forward.8} parent=72 // loop_footer
                %s251 = sadd.s32 1, %s247
              $region79: #{gpt_forward.8} parent=72 // loop_footer_branch
                %246 = sbr.rel target = $region75
              $region80: #{gpt_forward.8} parent=72 // loop_exit
                _
            $region73: #{gpt_forward.8} parent=64 // pred_fallthru
              _
          $region65: #{gpt_forward.8} parent=60 // pred_fallthru
            _
          %305 = vnop
        $region61: #{gpt_forward.8} parent=15 // pred_fallthru
          _
        // Predicated region
        $region99: #{gpt_forward.8} parent=15 // pred_check
          %p306 = pneg %p95
        $region100: #{gpt_forward.8} parent=15 // pred_check_branch
          %308 = sbr.rel (%p306) target = $region102
        $region101: #{gpt_forward.8} parent=15 // pred_region
          %s309 = sand.u32 %s85, 1
          %s310 = sand.u32 %s85, 1
          %s311 = smul.addr %s310, 16
          %s312 = scalar_lea.vmem [#allocation4], %s311
          %s313 = smul.addr %s16, 24
          %s314 = sadd.s32 2, %s313
          %s315 = smul.addr %s314, 2
          %s316 = scalar_lea.vmem %s2, %s315
          // Predicated region
          $region103: #{gpt_forward.8} parent=101 // pred_check
            _
          $region104: #{gpt_forward.8} parent=101 // pred_check_branch
            %318 = sbr.rel (0) target = $region106
          $region105: #{gpt_forward.8} parent=101 // pred_region
            // Predicated region
            $region107: #{gpt_forward.8} parent=105 // pred_check
              _
            $region108: #{gpt_forward.8} parent=105 // pred_check_branch
              %320 = sbr.rel target = $region110
            $region109: #{gpt_forward.8} parent=105 // pred_region
              // Predicated region
              $region122: #{gpt_forward.8} parent=109 // pred_check
                _
              $region123: #{gpt_forward.8} parent=109 // pred_check_branch
                %349 = sbr.rel (0) target = $region125
              $region124: #{gpt_forward.8} parent=109 // pred_region
                loop: start=0, step=1, limit=1
                $region126: #{gpt_forward.8} parent=124 // loop_pre_header
                  _
                $region127: #{gpt_forward.8} parent=124 // loop_header
                  %s351 = sphi 0, %s355
                  %p352 = scmp.ge.s32.totalorder %s351, 1
                  %s356 = sphi %s316, %s316
                  %s357 = sphi %s312, %s312
                $region128: #{gpt_forward.8} parent=124 // loop_header_branch
                  %354 = sbr.rel (%p352) target = $region132
                $region129: #{gpt_forward.8} parent=124 // loop_body
                  _
                $region130: #{gpt_forward.8} parent=124 // loop_footer
                  %s355 = sadd.s32 1, %s351
                $region131: #{gpt_forward.8} parent=124 // loop_footer_branch
                  %350 = sbr.rel target = $region127
                $region132: #{gpt_forward.8} parent=124 // loop_exit
                  _
                loop: start=0, step=1, limit=1
                $region133: #{gpt_forward.8} parent=124 // loop_pre_header
                  _
                $region134: #{gpt_forward.8} parent=124 // loop_header
                  %s360 = sphi 0, %s364
                  %p361 = scmp.ge.s32.totalorder %s360, 1
                  %s365 = sphi %s316, %s316
                  %s366 = sphi %s312, %s312
                $region135: #{gpt_forward.8} parent=124 // loop_header_branch
                  %363 = sbr.rel (%p361) target = $region139
                $region136: #{gpt_forward.8} parent=124 // loop_body
                  %v367 = vld [vmem:[%s365] sm:$0x3]
                  %368 = vst [vmem:[%s366] sm:$0x3] %v367
                  %v369 = vld [vmem:[%s365 + $0x6] sm:$0x3]
                  %370 = vst [vmem:[%s366 + $0x2] sm:$0x3] %v369
                  %v371 = vld [vmem:[%s365 + $0xc] sm:$0x3]
                  %372 = vst [vmem:[%s366 + $0x4] sm:$0x3] %v371
                  %v373 = vld [vmem:[%s365 + $0x12] sm:$0x3]
                  %374 = vst [vmem:[%s366 + $0x6] sm:$0x3] %v373
                  %v375 = vld [vmem:[%s365 + $0x18] sm:$0x3]
                  %376 = vst [vmem:[%s366 + $0x8] sm:$0x3] %v375
                  %v377 = vld [vmem:[%s365 + $0x1e] sm:$0x3]
                  %378 = vst [vmem:[%s366 + $0xa] sm:$0x3] %v377
                  %v379 = vld [vmem:[%s365 + $0x24] sm:$0x3]
                  %380 = vst [vmem:[%s366 + $0xc] sm:$0x3] %v379
                  %v381 = vld [vmem:[%s365 + $0x2a] sm:$0x3]
                  %382 = vst [vmem:[%s366 + $0xe] sm:$0x3] %v381
                $region137: #{gpt_forward.8} parent=124 // loop_footer
                  %s364 = sadd.s32 1, %s360
                $region138: #{gpt_forward.8} parent=124 // loop_footer_branch
                  %359 = sbr.rel target = $region134
                $region139: #{gpt_forward.8} parent=124 // loop_exit
                  _
              $region125: #{gpt_forward.8} parent=109 // pred_fallthru
                _
            $region110: #{gpt_forward.8} parent=105 // pred_fallthru
              _
            // Predicated region
            $region111: #{gpt_forward.8} parent=105 // pred_check
              _
            $region112: #{gpt_forward.8} parent=105 // pred_check_branch
              %322 = sbr.rel (0) target = $region114
            $region113: #{gpt_forward.8} parent=105 // pred_region
              loop: start=0, step=1, limit=1
              $region115: #{gpt_forward.8} parent=113 // loop_pre_header
                _
              $region116: #{gpt_forward.8} parent=113 // loop_header
                %s325 = sphi 0, %s329
                %p326 = scmp.ge.s32.totalorder %s325, 1
                %s330 = sphi %s316, %s316
                %s331 = sphi %s312, %s312
              $region117: #{gpt_forward.8} parent=113 // loop_header_branch
                %328 = sbr.rel (%p326) target = $region121
              $region118: #{gpt_forward.8} parent=113 // loop_body
                %v332 = vld [vmem:[%s330] sm:$0x3]
                %333 = vst [vmem:[%s331] sm:$0x3] %v332
                %v334 = vld [vmem:[%s330 + $0x6] sm:$0x3]
                %335 = vst [vmem:[%s331 + $0x2] sm:$0x3] %v334
                %v336 = vld [vmem:[%s330 + $0xc] sm:$0x3]
                %337 = vst [vmem:[%s331 + $0x4] sm:$0x3] %v336
                %v338 = vld [vmem:[%s330 + $0x12] sm:$0x3]
                %339 = vst [vmem:[%s331 + $0x6] sm:$0x3] %v338
                %v340 = vld [vmem:[%s330 + $0x18] sm:$0x3]
                %341 = vst [vmem:[%s331 + $0x8] sm:$0x3] %v340
                %v342 = vld [vmem:[%s330 + $0x1e] sm:$0x3]
                %343 = vst [vmem:[%s331 + $0xa] sm:$0x3] %v342
                %v344 = vld [vmem:[%s330 + $0x24] sm:$0x3]
                %345 = vst [vmem:[%s331 + $0xc] sm:$0x3] %v344
                %v346 = vld [vmem:[%s330 + $0x2a] sm:$0x3]
                %347 = vst [vmem:[%s331 + $0xe] sm:$0x3] %v346
              $region119: #{gpt_forward.8} parent=113 // loop_footer
                %s329 = sadd.s32 1, %s325
              $region120: #{gpt_forward.8} parent=113 // loop_footer_branch
                %324 = sbr.rel target = $region116
              $region121: #{gpt_forward.8} parent=113 // loop_exit
                _
            $region114: #{gpt_forward.8} parent=105 // pred_fallthru
              _
          $region106: #{gpt_forward.8} parent=101 // pred_fallthru
            _
          %383 = vnop
        $region102: #{gpt_forward.8} parent=15 // pred_fallthru
          _
      $region16: #{gpt_forward.8} parent=5 // pred_fallthru
        _
      %p384 = scmp.le.s32.totalorder 1, %s9
      %p385 = scmp.lt.s32.totalorder %s9, 3
      %p386 = pnand %p384, %p385
      %p387 = pneg %p386
      // Predicated region
      $region140: #{gpt_forward.8} parent=5 // pred_check
        _
      $region141: #{gpt_forward.8} parent=5 // pred_check_branch
        %389 = sbr.rel (%p386) target = $region143
      $region142: #{gpt_forward.8} parent=5 // pred_region
        %s390 = ssub.s32 %s9, 1
        %s391 = sand.u32 %s36, 1
        %s392 = sand.u32 %s36, 1
        %s393 = smul.addr %s392, 16
        %s394 = scalar_lea.vmem [#allocation2], %s393
        // Predicated region
        $region144: #{gpt_forward.8} parent=142 // pred_check
          %p395 = pneg %p49
        $region145: #{gpt_forward.8} parent=142 // pred_check_branch
          %397 = sbr.rel (%p395) target = $region147
        $region146: #{gpt_forward.8} parent=142 // pred_region
          _
        $region147: #{gpt_forward.8} parent=142 // pred_fallthru
          _
        %s398 = sand.u32 %s62, 1
        %s399 = sand.u32 %s62, 1
        %s400 = smul.addr %s399, 16
        %s401 = scalar_lea.vmem [#allocation3], %s400
        // Predicated region
        $region148: #{gpt_forward.8} parent=142 // pred_check
          %p402 = pneg %p75
        $region149: #{gpt_forward.8} parent=142 // pred_check_branch
          %404 = sbr.rel (%p402) target = $region151
        $region150: #{gpt_forward.8} parent=142 // pred_region
          _
        $region151: #{gpt_forward.8} parent=142 // pred_fallthru
          _
        %s405 = sand.u32 %s88, 1
        %s406 = sand.u32 %s88, 1
        %s407 = smul.addr %s406, 16
        %s408 = scalar_lea.vmem [#allocation4], %s407
        // Predicated region
        $region152: #{gpt_forward.8} parent=142 // pred_check
          %p409 = pneg %p101
        $region153: #{gpt_forward.8} parent=142 // pred_check_branch
          %411 = sbr.rel (%p409) target = $region155
        $region154: #{gpt_forward.8} parent=142 // pred_region
          _
        $region155: #{gpt_forward.8} parent=142 // pred_fallthru
          _
        %s412 = sand.u32 %s36, 1
        %s413 = sand.u32 %s36, 1
        %s414 = smul.addr %s413, 16
        %s415 = scalar_lea.vmem [#allocation2], %s414
        %p416 = pneg %p49
        %p417 = pneg %p46
        %s418 = sand.u32 %s62, 1
        %s419 = sand.u32 %s62, 1
        %s420 = smul.addr %s419, 16
        %s421 = scalar_lea.vmem [#allocation3], %s420
        %p422 = pneg %p75
        %p423 = pneg %p72
        %s424 = sand.u32 %s88, 1
        %s425 = sand.u32 %s88, 1
        %s426 = smul.addr %s425, 16
        %s427 = scalar_lea.vmem [#allocation4], %s426
        %p428 = pneg %p101
        %p429 = pneg %p98
        %p430 = pneg %p129
        %p431 = pneg %p126
        %p432 = scmp.lt.s32.totalorder %s18, 1
        %s433 = scalar_select %p432, %s18, 1
        %p434 = scmp.lt.s32.totalorder %s19, 0
        %s435 = scalar_select %p434, %s19, 0
        %s436 = sadd.s32 %s435, %s433
        %s437 = smul.addr %s436, 4
        %s438 = scalar_lea.vmem %s3, %s437
        %s439 = smul.u32 8, %s19
        %p440 = scmp.lt.s32.totalorder %s18, 1
        %s441 = scalar_select %p440, %s18, 1
        %p442 = scmp.lt.s32.totalorder %s19, 0
        %s443 = scalar_select %p442, %s19, 0
        %s444 = sadd.s32 %s443, %s441
        %s445 = smul.addr %s444, 4
        %s446 = scalar_lea.vmem %s3, %s445
        %v448 = vld [vmem:[%s394] sm:$0x3]
        %v449 = vld [vmem:[%s394 + $0x2] sm:$0x3]
        %v450 = vld [vmem:[%s394 + $0x4] sm:$0x3]
        %v451 = vld [vmem:[%s394 + $0x6] sm:$0x3]
        %v452 = vld [vmem:[%s394 + $0x8] sm:$0x3]
        %v453 = vld [vmem:[%s394 + $0xa] sm:$0x3]
        %v454 = vld [vmem:[%s394 + $0xc] sm:$0x3]
        %v455 = vld [vmem:[%s394 + $0xe] sm:$0x3]
        %v456 = vcombine.low %v448, %v450
        %v458 = vunpack.c.l.s4 1934713408
        %v459 = vunpack.c.0.s8 %v458
        %v460 = vlaneseq
        %v461 = vshrl.u32 %v460, 7
        %v462 = vsub.s32 %v459, %v461
        %v463 = vrot.slane %v456, %v462
        %v464 = vcombine.high %v463, 0
        %v465 = vcombine.low %v449, %v451
        %v467 = vunpack.c.l.s4 1934713408
        %v468 = vunpack.c.0.s8 %v467
        %v469 = vlaneseq
        %v470 = vshrl.u32 %v469, 7
        %v471 = vsub.s32 %v468, %v470
        %v472 = vrot.slane %v465, %v471
        %v473 = vcombine.high %v472, 0
        %v474 = vcombine.low %v452, %v454
        %v476 = vunpack.c.l.s4 1934713408
        %v477 = vunpack.c.0.s8 %v476
        %v478 = vlaneseq
        %v479 = vshrl.u32 %v478, 7
        %v480 = vsub.s32 %v477, %v479
        %v481 = vrot.slane %v474, %v480
        %v482 = vcombine.high %v481, 0
        %v483 = vcombine.low %v453, %v455
        %v485 = vunpack.c.l.s4 1934713408
        %v486 = vunpack.c.0.s8 %v485
        %v487 = vlaneseq
        %v488 = vshrl.u32 %v487, 7
        %v489 = vsub.s32 %v486, %v488
        %v490 = vrot.slane %v483, %v489
        %v491 = vcombine.high %v490, 0
        %v494 = vpack.i.b16 %v472, %v463
        %v495 = vshrl.u32 %v463, 16
        %v496 = vshrl.u32 %v472, 16
        %v497 = vpack.i.b16 %v496, %v495
        %v500 = vpack.i.b16 %v473, %v464
        %v501 = vshrl.u32 %v464, 16
        %v502 = vshrl.u32 %v473, 16
        %v503 = vpack.i.b16 %v502, %v501
        %v506 = vpack.i.b16 %v490, %v481
        %v507 = vshrl.u32 %v481, 16
        %v508 = vshrl.u32 %v490, 16
        %v509 = vpack.i.b16 %v508, %v507
        %v512 = vpack.i.b16 %v491, %v482
        %v513 = vshrl.u32 %v482, 16
        %v514 = vshrl.u32 %v491, 16
        %v515 = vpack.i.b16 %v514, %v513
        %s516 = smul.u32 %s19, 8
        %v517 = vlaneseq
        %v518 = vshrl.u32 %v517, 7
        %v519 = vstv %s516
        %v520 = vadd.s32 %v519, %v518
        %s521 = sadd.s32 %s19, 1
        // While loop
        $region156: #{gpt_forward.8} parent=142 // loop_pre_header
          _
        $region157: #{gpt_forward.8} parent=142 // loop_header
          %s523 = sphi 0, %s525
          %p524 = scmp.ge.s32.totalorder %s523, %s521
          %v528 = vphi -1e+30, %v953
          %v529 = vphi -1e+30, %v954
          %v530 = vphi -1e+30, %v955
          %v531 = vphi -1e+30, %v956
          %v532 = vphi 0.0, %v997
          %v533 = vphi 0.0, %v998
          %v534 = vphi 0.0, %v999
          %v535 = vphi 0.0, %v1000
          %v536 = vphi 0.0, %v1226
          %v537 = vphi 0.0, %v1227
          %v538 = vphi 0.0, %v1228
          %v539 = vphi 0.0, %v1229
        $region158: #{gpt_forward.8} parent=142 // loop_header_branch
          %527 = sbr.rel (%p524) target = $region162
        $region159: #{gpt_forward.8} parent=142 // loop_body
          %s540 = smul.u32 %s523, 8
          %s541 = smul.addr %s540, 2
          %s542 = scalar_lea.vmem %s401, %s541 [#allocation3]
          %v543 = vld [vmem:[%s542] sm:$0x3]
          %v544 = vld [vmem:[%s542 + $0x2] sm:$0x3]
          %v545 = vld [vmem:[%s542 + $0x4] sm:$0x3]
          %v546 = vld [vmem:[%s542 + $0x6] sm:$0x3]
          %v547 = vld [vmem:[%s542 + $0x8] sm:$0x3]
          %v548 = vld [vmem:[%s542 + $0xa] sm:$0x3]
          %v549 = vld [vmem:[%s542 + $0xc] sm:$0x3]
          %v550 = vld [vmem:[%s542 + $0xe] sm:$0x3]
          %v551 = vcombine.low %v543, %v545
          %v553 = vunpack.c.l.s4 1934713408
          %v554 = vunpack.c.0.s8 %v553
          %v555 = vlaneseq
          %v556 = vshrl.u32 %v555, 7
          %v557 = vsub.s32 %v554, %v556
          %v558 = vrot.slane %v551, %v557
          %v559 = vcombine.high %v558, 0
          %v560 = vcombine.low %v544, %v546
          %v562 = vunpack.c.l.s4 1934713408
          %v563 = vunpack.c.0.s8 %v562
          %v564 = vlaneseq
          %v565 = vshrl.u32 %v564, 7
          %v566 = vsub.s32 %v563, %v565
          %v567 = vrot.slane %v560, %v566
          %v568 = vcombine.high %v567, 0
          %v569 = vcombine.low %v547, %v549
          %v571 = vunpack.c.l.s4 1934713408
          %v572 = vunpack.c.0.s8 %v571
          %v573 = vlaneseq
          %v574 = vshrl.u32 %v573, 7
          %v575 = vsub.s32 %v572, %v574
          %v576 = vrot.slane %v569, %v575
          %v577 = vcombine.high %v576, 0
          %v578 = vcombine.low %v548, %v550
          %v580 = vunpack.c.l.s4 1934713408
          %v581 = vunpack.c.0.s8 %v580
          %v582 = vlaneseq
          %v583 = vshrl.u32 %v582, 7
          %v584 = vsub.s32 %v581, %v583
          %v585 = vrot.slane %v578, %v584
          %v586 = vcombine.high %v585, 0
          %v589 = vpack.i.b16 %v567, %v558
          %v590 = vshrl.u32 %v558, 16
          %v591 = vshrl.u32 %v567, 16
          %v592 = vpack.i.b16 %v591, %v590
          %v595 = vpack.i.b16 %v568, %v559
          %v596 = vshrl.u32 %v559, 16
          %v597 = vshrl.u32 %v568, 16
          %v598 = vpack.i.b16 %v597, %v596
          %v601 = vpack.i.b16 %v585, %v576
          %v602 = vshrl.u32 %v576, 16
          %v603 = vshrl.u32 %v585, 16
          %v604 = vpack.i.b16 %v603, %v602
          %v607 = vpack.i.b16 %v586, %v577
          %v608 = vshrl.u32 %v577, 16
          %v609 = vshrl.u32 %v586, 16
          %v610 = vpack.i.b16 %v609, %v608
          %s611 = smul.addr %s540, 2
          %s612 = scalar_lea.vmem %s408, %s611 [#allocation4]
          %v613 = vld [vmem:[%s612] sm:$0x3]
          %v614 = vld [vmem:[%s612 + $0x2] sm:$0x3]
          %v615 = vld [vmem:[%s612 + $0x4] sm:$0x3]
          %v616 = vld [vmem:[%s612 + $0x6] sm:$0x3]
          %v617 = vld [vmem:[%s612 + $0x8] sm:$0x3]
          %v618 = vld [vmem:[%s612 + $0xa] sm:$0x3]
          %v619 = vld [vmem:[%s612 + $0xc] sm:$0x3]
          %v620 = vld [vmem:[%s612 + $0xe] sm:$0x3]
          %v621 = vcombine.low %v613, %v615
          %v623 = vunpack.c.l.s4 1934713408
          %v624 = vunpack.c.0.s8 %v623
          %v625 = vlaneseq
          %v626 = vshrl.u32 %v625, 7
          %v627 = vsub.s32 %v624, %v626
          %v628 = vrot.slane %v621, %v627
          %v629 = vcombine.high %v628, 0
          %v630 = vcombine.low %v614, %v616
          %v632 = vunpack.c.l.s4 1934713408
          %v633 = vunpack.c.0.s8 %v632
          %v634 = vlaneseq
          %v635 = vshrl.u32 %v634, 7
          %v636 = vsub.s32 %v633, %v635
          %v637 = vrot.slane %v630, %v636
          %v638 = vcombine.high %v637, 0
          %v639 = vcombine.low %v617, %v619
          %v641 = vunpack.c.l.s4 1934713408
          %v642 = vunpack.c.0.s8 %v641
          %v643 = vlaneseq
          %v644 = vshrl.u32 %v643, 7
          %v645 = vsub.s32 %v642, %v644
          %v646 = vrot.slane %v639, %v645
          %v647 = vcombine.high %v646, 0
          %v648 = vcombine.low %v618, %v620
          %v650 = vunpack.c.l.s4 1934713408
          %v651 = vunpack.c.0.s8 %v650
          %v652 = vlaneseq
          %v653 = vshrl.u32 %v652, 7
          %v654 = vsub.s32 %v651, %v653
          %v655 = vrot.slane %v648, %v654
          %v656 = vcombine.high %v655, 0
          %v659 = vpack.i.b16 %v637, %v628
          %v660 = vshrl.u32 %v628, 16
          %v661 = vshrl.u32 %v637, 16
          %v662 = vpack.i.b16 %v661, %v660
          %v665 = vpack.i.b16 %v638, %v629
          %v666 = vshrl.u32 %v629, 16
          %v667 = vshrl.u32 %v638, 16
          %v668 = vpack.i.b16 %v667, %v666
          %v671 = vpack.i.b16 %v655, %v646
          %v672 = vshrl.u32 %v646, 16
          %v673 = vshrl.u32 %v655, 16
          %v674 = vpack.i.b16 %v673, %v672
          %v677 = vpack.i.b16 %v656, %v647
          %v678 = vshrl.u32 %v647, 16
          %v679 = vshrl.u32 %v656, 16
          %v680 = vpack.i.b16 %v679, %v678
          %v681 = vcombine.low %v494, %v506
          %v683 = vunpack.c.l.s4 1983009808
          %v684 = vunpack.c.0.s8 %v683
          %v685 = vlaneseq
          %v686 = vshrl.u32 %v685, 7
          %v687 = vsub.s32 %v684, %v686
          %v688 = vrot.slane %v681, %v687
          %v689 = vcombine.low %v589, %v601
          %v691 = vunpack.c.l.s4 1983009808
          %v692 = vunpack.c.0.s8 %v691
          %v693 = vlaneseq
          %v694 = vshrl.u32 %v693, 7
          %v695 = vsub.s32 %v692, %v694
          %v696 = vrot.slane %v689, %v695
          %vm697 = vcmask 64512
          %v699 = vsel %vm697, %v688, 0
          %v702 = vsel %vm697, %v696, 0
          %704 = vmatprep.subr.bf16.mxu0 0
          %705 = vmatpush1.bf16.xpose.msra.mxu0 %v702
          %706 = vmatprep.subr.bf16.mxu0 0
          %707 = vmatpush1.bf16.xpose.msra.mxu0 0
          %708 = vmatprep.subr.bf16.mxu0 0
          %709 = vmatpush1.bf16.xpose.msra.mxu0 0
          %710 = vmatprep.subr.bf16.mxu0 0
          %711 = vmatpush1.bf16.xpose.msra.mxu0 0
          %712 = vmatprep.subr.bf16.mxu0 0
          %713 = vmatpush1.bf16.xpose.msra.mxu0 0
          %714 = vmatprep.subr.bf16.mxu0 0
          %715 = vmatpush1.bf16.xpose.msra.mxu0 0
          %716 = vmatprep.subr.bf16.mxu0 0
          %717 = vmatpush1.bf16.xpose.msra.mxu0 0
          %718 = vmatprep.subr.bf16.mxu0 0
          %719 = vmatpush1.bf16.xpose.msra.mxu0 0
          %720 = vmatprep.subr.bf16.mxu0 0
          %721 = vmatpush1.bf16.xpose.msra.mxu0 0
          %722 = vmatprep.subr.bf16.mxu0 0
          %723 = vmatpush1.bf16.xpose.msra.mxu0 0
          %724 = vmatprep.subr.bf16.mxu0 0
          %725 = vmatpush1.bf16.xpose.msra.mxu0 0
          %726 = vmatprep.subr.bf16.mxu0 0
          %727 = vmatpush1.bf16.xpose.msra.mxu0 0
          %728 = vmatprep.subr.bf16.mxu0 0
          %729 = vmatpush1.bf16.xpose.msra.mxu0 0
          %730 = vmatprep.subr.bf16.mxu0 0
          %731 = vmatpush1.bf16.xpose.msra.mxu0 0
          %732 = vmatprep.subr.bf16.mxu0 0
          %733 = vmatpush1.bf16.xpose.msra.mxu0 0
          %734 = vmatprep.subr.bf16.mxu0 0
          %735 = vmatpush1.bf16.xpose.msra.mxu0 0
          %736 = vmatprep.mubr.bf16.mxu0 0
          %737 = vmatmul.mubr.bf16.gmra.mrb[0].mxu0 %v699
          %v738 = vpop.f32.mrb[0].mxu0
          %v739 = vadd.f32 0.0, %v738
          %v740 = vpop.f32.mrb[0].mxu0
          %v741 = vpop.f32.mrb[0].mxu0
          %v742 = vpop.f32.mrb[0].mxu0
          %743 = vdwg.mxu0
          %v744 = vcombine.low %v497, %v509
          %v746 = vunpack.c.l.s4 1983009808
          %v747 = vunpack.c.0.s8 %v746
          %v748 = vlaneseq
          %v749 = vshrl.u32 %v748, 7
          %v750 = vsub.s32 %v747, %v749
          %v751 = vrot.slane %v744, %v750
          %v752 = vcombine.low %v592, %v604
          %v754 = vunpack.c.l.s4 1983009808
          %v755 = vunpack.c.0.s8 %v754
          %v756 = vlaneseq
          %v757 = vshrl.u32 %v756, 7
          %v758 = vsub.s32 %v755, %v757
          %v759 = vrot.slane %v752, %v758
          %v761 = vsel %vm697, %v751, 0
          %v764 = vsel %vm697, %v759, 0
          %766 = vmatprep.subr.bf16.mxu0 0
          %767 = vmatpush1.bf16.xpose.msra.mxu0 %v764
          %768 = vmatprep.subr.bf16.mxu0 0
          %769 = vmatpush1.bf16.xpose.msra.mxu0 0
          %770 = vmatprep.subr.bf16.mxu0 0
          %771 = vmatpush1.bf16.xpose.msra.mxu0 0
          %772 = vmatprep.subr.bf16.mxu0 0
          %773 = vmatpush1.bf16.xpose.msra.mxu0 0
          %774 = vmatprep.subr.bf16.mxu0 0
          %775 = vmatpush1.bf16.xpose.msra.mxu0 0
          %776 = vmatprep.subr.bf16.mxu0 0
          %777 = vmatpush1.bf16.xpose.msra.mxu0 0
          %778 = vmatprep.subr.bf16.mxu0 0
          %779 = vmatpush1.bf16.xpose.msra.mxu0 0
          %780 = vmatprep.subr.bf16.mxu0 0
          %781 = vmatpush1.bf16.xpose.msra.mxu0 0
          %782 = vmatprep.subr.bf16.mxu0 0
          %783 = vmatpush1.bf16.xpose.msra.mxu0 0
          %784 = vmatprep.subr.bf16.mxu0 0
          %785 = vmatpush1.bf16.xpose.msra.mxu0 0
          %786 = vmatprep.subr.bf16.mxu0 0
          %787 = vmatpush1.bf16.xpose.msra.mxu0 0
          %788 = vmatprep.subr.bf16.mxu0 0
          %789 = vmatpush1.bf16.xpose.msra.mxu0 0
          %790 = vmatprep.subr.bf16.mxu0 0
          %791 = vmatpush1.bf16.xpose.msra.mxu0 0
          %792 = vmatprep.subr.bf16.mxu0 0
          %793 = vmatpush1.bf16.xpose.msra.mxu0 0
          %794 = vmatprep.subr.bf16.mxu0 0
          %795 = vmatpush1.bf16.xpose.msra.mxu0 0
          %796 = vmatprep.subr.bf16.mxu0 0
          %797 = vmatpush1.bf16.xpose.msra.mxu0 0
          %798 = vmatprep.mubr.bf16.mxu0 0
          %799 = vmatmul.mubr.bf16.gmra.mrb[0].mxu0 %v761
          %v800 = vpop.f32.mrb[0].mxu0
          %v801 = vadd.f32 0.0, %v800
          %v802 = vpop.f32.mrb[0].mxu0
          %v803 = vpop.f32.mrb[0].mxu0
          %v804 = vpop.f32.mrb[0].mxu0
          %805 = vdwg.mxu0
          %v806 = vcombine.low %v500, %v512
          %v808 = vunpack.c.l.s4 1983009808
          %v809 = vunpack.c.0.s8 %v808
          %v810 = vlaneseq
          %v811 = vshrl.u32 %v810, 7
          %v812 = vsub.s32 %v809, %v811
          %v813 = vrot.slane %v806, %v812
          %v814 = vcombine.low %v595, %v607
          %v816 = vunpack.c.l.s4 1983009808
          %v817 = vunpack.c.0.s8 %v816
          %v818 = vlaneseq
          %v819 = vshrl.u32 %v818, 7
          %v820 = vsub.s32 %v817, %v819
          %v821 = vrot.slane %v814, %v820
          %v823 = vsel %vm697, %v813, 0
          %v826 = vsel %vm697, %v821, 0
          %828 = vmatprep.subr.bf16.mxu0 0
          %829 = vmatpush1.bf16.xpose.msra.mxu0 %v826
          %830 = vmatprep.subr.bf16.mxu0 0
          %831 = vmatpush1.bf16.xpose.msra.mxu0 0
          %832 = vmatprep.subr.bf16.mxu0 0
          %833 = vmatpush1.bf16.xpose.msra.mxu0 0
          %834 = vmatprep.subr.bf16.mxu0 0
          %835 = vmatpush1.bf16.xpose.msra.mxu0 0
          %836 = vmatprep.subr.bf16.mxu0 0
          %837 = vmatpush1.bf16.xpose.msra.mxu0 0
          %838 = vmatprep.subr.bf16.mxu0 0
          %839 = vmatpush1.bf16.xpose.msra.mxu0 0
          %840 = vmatprep.subr.bf16.mxu0 0
          %841 = vmatpush1.bf16.xpose.msra.mxu0 0
          %842 = vmatprep.subr.bf16.mxu0 0
          %843 = vmatpush1.bf16.xpose.msra.mxu0 0
          %844 = vmatprep.subr.bf16.mxu0 0
          %845 = vmatpush1.bf16.xpose.msra.mxu0 0
          %846 = vmatprep.subr.bf16.mxu0 0
          %847 = vmatpush1.bf16.xpose.msra.mxu0 0
          %848 = vmatprep.subr.bf16.mxu0 0
          %849 = vmatpush1.bf16.xpose.msra.mxu0 0
          %850 = vmatprep.subr.bf16.mxu0 0
          %851 = vmatpush1.bf16.xpose.msra.mxu0 0
          %852 = vmatprep.subr.bf16.mxu0 0
          %853 = vmatpush1.bf16.xpose.msra.mxu0 0
          %854 = vmatprep.subr.bf16.mxu0 0
          %855 = vmatpush1.bf16.xpose.msra.mxu0 0
          %856 = vmatprep.subr.bf16.mxu0 0
          %857 = vmatpush1.bf16.xpose.msra.mxu0 0
          %858 = vmatprep.subr.bf16.mxu0 0
          %859 = vmatpush1.bf16.xpose.msra.mxu0 0
          %860 = vmatprep.mubr.bf16.mxu0 0
          %861 = vmatmul.mubr.bf16.gmra.mrb[0].mxu0 %v823
          %v862 = vpop.f32.mrb[0].mxu0
          %v863 = vadd.f32 0.0, %v862
          %v864 = vpop.f32.mrb[0].mxu0
          %v865 = vpop.f32.mrb[0].mxu0
          %v866 = vpop.f32.mrb[0].mxu0
          %867 = vdwg.mxu0
          %v868 = vcombine.low %v503, %v515
          %v870 = vunpack.c.l.s4 1983009808
          %v871 = vunpack.c.0.s8 %v870
          %v872 = vlaneseq
          %v873 = vshrl.u32 %v872, 7
          %v874 = vsub.s32 %v871, %v873
          %v875 = vrot.slane %v868, %v874
          %v876 = vcombine.low %v598, %v610
          %v878 = vunpack.c.l.s4 1983009808
          %v879 = vunpack.c.0.s8 %v878
          %v880 = vlaneseq
          %v881 = vshrl.u32 %v880, 7
          %v882 = vsub.s32 %v879, %v881
          %v883 = vrot.slane %v876, %v882
          %v885 = vsel %vm697, %v875, 0
          %v888 = vsel %vm697, %v883, 0
          %890 = vmatprep.subr.bf16.mxu0 0
          %891 = vmatpush1.bf16.xpose.msra.mxu0 %v888
          %892 = vmatprep.subr.bf16.mxu0 0
          %893 = vmatpush1.bf16.xpose.msra.mxu0 0
          %894 = vmatprep.subr.bf16.mxu0 0
          %895 = vmatpush1.bf16.xpose.msra.mxu0 0
          %896 = vmatprep.subr.bf16.mxu0 0
          %897 = vmatpush1.bf16.xpose.msra.mxu0 0
          %898 = vmatprep.subr.bf16.mxu0 0
          %899 = vmatpush1.bf16.xpose.msra.mxu0 0
          %900 = vmatprep.subr.bf16.mxu0 0
          %901 = vmatpush1.bf16.xpose.msra.mxu0 0
          %902 = vmatprep.subr.bf16.mxu0 0
          %903 = vmatpush1.bf16.xpose.msra.mxu0 0
          %904 = vmatprep.subr.bf16.mxu0 0
          %905 = vmatpush1.bf16.xpose.msra.mxu0 0
          %906 = vmatprep.subr.bf16.mxu0 0
          %907 = vmatpush1.bf16.xpose.msra.mxu0 0
          %908 = vmatprep.subr.bf16.mxu0 0
          %909 = vmatpush1.bf16.xpose.msra.mxu0 0
          %910 = vmatprep.subr.bf16.mxu0 0
          %911 = vmatpush1.bf16.xpose.msra.mxu0 0
          %912 = vmatprep.subr.bf16.mxu0 0
          %913 = vmatpush1.bf16.xpose.msra.mxu0 0
          %914 = vmatprep.subr.bf16.mxu0 0
          %915 = vmatpush1.bf16.xpose.msra.mxu0 0
          %916 = vmatprep.subr.bf16.mxu0 0
          %917 = vmatpush1.bf16.xpose.msra.mxu0 0
          %918 = vmatprep.subr.bf16.mxu0 0
          %919 = vmatpush1.bf16.xpose.msra.mxu0 0
          %920 = vmatprep.subr.bf16.mxu0 0
          %921 = vmatpush1.bf16.xpose.msra.mxu0 0
          %922 = vmatprep.mubr.bf16.mxu0 0
          %923 = vmatmul.mubr.bf16.gmra.mrb[0].mxu0 %v885
          %v924 = vpop.f32.mrb[0].mxu0
          %v925 = vadd.f32 0.0, %v924
          %v926 = vpop.f32.mrb[0].mxu0
          %v927 = vpop.f32.mrb[0].mxu0
          %v928 = vpop.f32.mrb[0].mxu0
          %929 = vdwg.mxu0
          %v930 = vlaneseq
          %v931 = vand.u32 %v930, 127
          %v932 = vstv %s540
          %v933 = vadd.s32 %v932, %v931
          %vm934 = vcmp.ge.s32.totalorder %v520, %v933
          %v935 = vsel %vm934, 1, 0
          %vm936 = vcmp.eq.s32.totalorder %v935, 1
          %v937 = vsel %vm936, %v739, -1e+30
          %v938 = vsel %vm936, %v801, -1e+30
          %v939 = vsel %vm936, %v863, -1e+30
          %v940 = vsel %vm936, %v925, -1e+30
          %v941 = vsel %vm697, %v937, -inf
          %942 = vmax.xlane.f32.xlu0 %v941
          %v943 = vpop.xlane.xlu0 %942
          %v944 = vsel %vm697, %v938, -inf
          %945 = vmax.xlane.f32.xlu0 %v944
          %v946 = vpop.xlane.xlu0 %945
          %v947 = vsel %vm697, %v939, -inf
          %948 = vmax.xlane.f32.xlu0 %v947
          %v949 = vpop.xlane.xlu0 %948
          %v950 = vsel %vm697, %v940, -inf
          %951 = vmax.xlane.f32.xlu0 %v950
          %v952 = vpop.xlane.xlu0 %951
          %v953 = vmax.f32 %v528, %v943
          %v954 = vmax.f32 %v529, %v946
          %v955 = vmax.f32 %v530, %v949
          %v956 = vmax.f32 %v531, %v952
          %v957 = vsub.f32 %v528, %v953
          %v958 = vsub.f32 %v529, %v954
          %v959 = vsub.f32 %v530, %v955
          %v960 = vsub.f32 %v531, %v956
          %v961 = vmul.f32 %v957, 1.442695
          %v962 = vpow.pop %v961
          %v963 = vmul.f32 %v958, 1.442695
          %v964 = vpow.pop %v963
          %v965 = vmul.f32 %v959, 1.442695
          %v966 = vpow.pop %v965
          %v967 = vmul.f32 %v960, 1.442695
          %v968 = vpow.pop %v967
          %v969 = vsub.f32 %v937, %v953
          %v970 = vsub.f32 %v938, %v954
          %v971 = vsub.f32 %v939, %v955
          %v972 = vsub.f32 %v940, %v956
          %v973 = vmul.f32 %v969, 1.442695
          %v974 = vpow.pop %v973
          %v975 = vmul.f32 %v970, 1.442695
          %v976 = vpow.pop %v975
          %v977 = vmul.f32 %v971, 1.442695
          %v978 = vpow.pop %v977
          %v979 = vmul.f32 %v972, 1.442695
          %v980 = vpow.pop %v979
          %v981 = vmul.f32 %v962, %v532
          %v982 = vmul.f32 %v964, %v533
          %v983 = vmul.f32 %v966, %v534
          %v984 = vmul.f32 %v968, %v535
          %v985 = vsel %vm697, %v974, 0.0
          %986 = vadd.xlane.f32.xlu0 %v985
          %v987 = vpop.xlane.xlu0 %986
          %v988 = vsel %vm697, %v976, 0.0
          %989 = vadd.xlane.f32.xlu0 %v988
          %v990 = vpop.xlane.xlu0 %989
          %v991 = vsel %vm697, %v978, 0.0
          %992 = vadd.xlane.f32.xlu0 %v991
          %v993 = vpop.xlane.xlu0 %992
          %v994 = vsel %vm697, %v980, 0.0
          %995 = vadd.xlane.f32.xlu0 %v994
          %v996 = vpop.xlane.xlu0 %995
          %v997 = vadd.f32 %v981, %v987
          %v998 = vadd.f32 %v982, %v990
          %v999 = vadd.f32 %v983, %v993
          %v1000 = vadd.f32 %v984, %v996
          %v1001 = vmul.f32 %v962, %v536
          %v1002 = vmul.f32 %v964, %v537
          %v1003 = vmul.f32 %v966, %v538
          %v1004 = vmul.f32 %v968, %v539
          %v1005 = vpack.c.bf16 %v974, %v974
          %v1006 = vpack.c.bf16 %v976, %v976
          %v1007 = vpack.c.bf16 %v978, %v978
          %v1008 = vpack.c.bf16 %v980, %v980
          %v1009 = vcombine.low %v659, %v671
          %v1011 = vunpack.c.l.s4 1983009808
          %v1012 = vunpack.c.0.s8 %v1011
          %v1013 = vlaneseq
          %v1014 = vshrl.u32 %v1013, 7
          %v1015 = vsub.s32 %v1012, %v1014
          %v1016 = vrot.slane %v1009, %v1015
          %v1018 = vsel %vm697, %v1005, 0
          %vm1020 = vcmask 1043456
          %v1022 = vsel %vm1020, %v1016, 0
          %1024 = vmatprep.subr.bf16.mxu0 0
          %1025 = vmatpush1.bf16.msra.mxu0 %v1022
          %1026 = vmatprep.subr.bf16.mxu0 0
          %1027 = vmatpush1.bf16.msra.mxu0 0
          %1028 = vmatprep.subr.bf16.mxu0 0
          %1029 = vmatpush1.bf16.msra.mxu0 0
          %1030 = vmatprep.subr.bf16.mxu0 0
          %1031 = vmatpush1.bf16.msra.mxu0 0
          %1032 = vmatprep.subr.bf16.mxu0 0
          %1033 = vmatpush1.bf16.msra.mxu0 0
          %1034 = vmatprep.subr.bf16.mxu0 0
          %1035 = vmatpush1.bf16.msra.mxu0 0
          %1036 = vmatprep.subr.bf16.mxu0 0
          %1037 = vmatpush1.bf16.msra.mxu0 0
          %1038 = vmatprep.subr.bf16.mxu0 0
          %1039 = vmatpush1.bf16.msra.mxu0 0
          %1040 = vmatprep.subr.bf16.mxu0 0
          %1041 = vmatpush1.bf16.msra.mxu0 0
          %1042 = vmatprep.subr.bf16.mxu0 0
          %1043 = vmatpush1.bf16.msra.mxu0 0
          %1044 = vmatprep.subr.bf16.mxu0 0
          %1045 = vmatpush1.bf16.msra.mxu0 0
          %1046 = vmatprep.subr.bf16.mxu0 0
          %1047 = vmatpush1.bf16.msra.mxu0 0
          %1048 = vmatprep.subr.bf16.mxu0 0
          %1049 = vmatpush1.bf16.msra.mxu0 0
          %1050 = vmatprep.subr.bf16.mxu0 0
          %1051 = vmatpush1.bf16.msra.mxu0 0
          %1052 = vmatprep.subr.bf16.mxu0 0
          %1053 = vmatpush1.bf16.msra.mxu0 0
          %1054 = vmatprep.subr.bf16.mxu0 0
          %1055 = vmatpush1.bf16.msra.mxu0 0
          %1056 = vmatprep.mubr.bf16.mxu0 0
          %1057 = vmatmul.mubr.bf16.gmra.mrb[0].mxu0 %v1018
          %v1058 = vpop.f32.mrb[0].mxu0
          %v1059 = vadd.f32 0.0, %v1058
          %v1060 = vpop.f32.mrb[0].mxu0
          %v1061 = vpop.f32.mrb[0].mxu0
          %v1062 = vpop.f32.mrb[0].mxu0
          %1063 = vdwg.mxu0
          %v1064 = vcombine.low %v662, %v674
          %v1066 = vunpack.c.l.s4 1983009808
          %v1067 = vunpack.c.0.s8 %v1066
          %v1068 = vlaneseq
          %v1069 = vshrl.u32 %v1068, 7
          %v1070 = vsub.s32 %v1067, %v1069
          %v1071 = vrot.slane %v1064, %v1070
          %v1073 = vsel %vm697, %v1006, 0
          %v1076 = vsel %vm1020, %v1071, 0
          %1078 = vmatprep.subr.bf16.mxu0 0
          %1079 = vmatpush1.bf16.msra.mxu0 %v1076
          %1080 = vmatprep.subr.bf16.mxu0 0
          %1081 = vmatpush1.bf16.msra.mxu0 0
          %1082 = vmatprep.subr.bf16.mxu0 0
          %1083 = vmatpush1.bf16.msra.mxu0 0
          %1084 = vmatprep.subr.bf16.mxu0 0
          %1085 = vmatpush1.bf16.msra.mxu0 0
          %1086 = vmatprep.subr.bf16.mxu0 0
          %1087 = vmatpush1.bf16.msra.mxu0 0
          %1088 = vmatprep.subr.bf16.mxu0 0
          %1089 = vmatpush1.bf16.msra.mxu0 0
          %1090 = vmatprep.subr.bf16.mxu0 0
          %1091 = vmatpush1.bf16.msra.mxu0 0
          %1092 = vmatprep.subr.bf16.mxu0 0
          %1093 = vmatpush1.bf16.msra.mxu0 0
          %1094 = vmatprep.subr.bf16.mxu0 0
          %1095 = vmatpush1.bf16.msra.mxu0 0
          %1096 = vmatprep.subr.bf16.mxu0 0
          %1097 = vmatpush1.bf16.msra.mxu0 0
          %1098 = vmatprep.subr.bf16.mxu0 0
          %1099 = vmatpush1.bf16.msra.mxu0 0
          %1100 = vmatprep.subr.bf16.mxu0 0
          %1101 = vmatpush1.bf16.msra.mxu0 0
          %1102 = vmatprep.subr.bf16.mxu0 0
          %1103 = vmatpush1.bf16.msra.mxu0 0
          %1104 = vmatprep.subr.bf16.mxu0 0
          %1105 = vmatpush1.bf16.msra.mxu0 0
          %1106 = vmatprep.subr.bf16.mxu0 0
          %1107 = vmatpush1.bf16.msra.mxu0 0
          %1108 = vmatprep.subr.bf16.mxu0 0
          %1109 = vmatpush1.bf16.msra.mxu0 0
          %1110 = vmatprep.mubr.bf16.mxu0 0
          %1111 = vmatmul.mubr.bf16.gmra.mrb[0].mxu0 %v1073
          %v1112 = vpop.f32.mrb[0].mxu0
          %v1113 = vadd.f32 0.0, %v1112
          %v1114 = vpop.f32.mrb[0].mxu0
          %v1115 = vpop.f32.mrb[0].mxu0
          %v1116 = vpop.f32.mrb[0].mxu0
          %1117 = vdwg.mxu0
          %v1118 = vcombine.low %v665, %v677
          %v1120 = vunpack.c.l.s4 1983009808
          %v1121 = vunpack.c.0.s8 %v1120
          %v1122 = vlaneseq
          %v1123 = vshrl.u32 %v1122, 7
          %v1124 = vsub.s32 %v1121, %v1123
          %v1125 = vrot.slane %v1118, %v1124
          %v1127 = vsel %vm697, %v1007, 0
          %v1130 = vsel %vm1020, %v1125, 0
          %1132 = vmatprep.subr.bf16.mxu0 0
          %1133 = vmatpush1.bf16.msra.mxu0 %v1130
          %1134 = vmatprep.subr.bf16.mxu0 0
          %1135 = vmatpush1.bf16.msra.mxu0 0
          %1136 = vmatprep.subr.bf16.mxu0 0
          %1137 = vmatpush1.bf16.msra.mxu0 0
          %1138 = vmatprep.subr.bf16.mxu0 0
          %1139 = vmatpush1.bf16.msra.mxu0 0
          %1140 = vmatprep.subr.bf16.mxu0 0
          %1141 = vmatpush1.bf16.msra.mxu0 0
          %1142 = vmatprep.subr.bf16.mxu0 0
          %1143 = vmatpush1.bf16.msra.mxu0 0
          %1144 = vmatprep.subr.bf16.mxu0 0
          %1145 = vmatpush1.bf16.msra.mxu0 0
          %1146 = vmatprep.subr.bf16.mxu0 0
          %1147 = vmatpush1.bf16.msra.mxu0 0
          %1148 = vmatprep.subr.bf16.mxu0 0
          %1149 = vmatpush1.bf16.msra.mxu0 0
          %1150 = vmatprep.subr.bf16.mxu0 0
          %1151 = vmatpush1.bf16.msra.mxu0 0
          %1152 = vmatprep.subr.bf16.mxu0 0
          %1153 = vmatpush1.bf16.msra.mxu0 0
          %1154 = vmatprep.subr.bf16.mxu0 0
          %1155 = vmatpush1.bf16.msra.mxu0 0
          %1156 = vmatprep.subr.bf16.mxu0 0
          %1157 = vmatpush1.bf16.msra.mxu0 0
          %1158 = vmatprep.subr.bf16.mxu0 0
          %1159 = vmatpush1.bf16.msra.mxu0 0
          %1160 = vmatprep.subr.bf16.mxu0 0
          %1161 = vmatpush1.bf16.msra.mxu0 0
          %1162 = vmatprep.subr.bf16.mxu0 0
          %1163 = vmatpush1.bf16.msra.mxu0 0
          %1164 = vmatprep.mubr.bf16.mxu0 0
          %1165 = vmatmul.mubr.bf16.gmra.mrb[0].mxu0 %v1127
          %v1166 = vpop.f32.mrb[0].mxu0
          %v1167 = vadd.f32 0.0, %v1166
          %v1168 = vpop.f32.mrb[0].mxu0
          %v1169 = vpop.f32.mrb[0].mxu0
          %v1170 = vpop.f32.mrb[0].mxu0
          %1171 = vdwg.mxu0
          %v1172 = vcombine.low %v668, %v680
          %v1174 = vunpack.c.l.s4 1983009808
          %v1175 = vunpack.c.0.s8 %v1174
          %v1176 = vlaneseq
          %v1177 = vshrl.u32 %v1176, 7
          %v1178 = vsub.s32 %v1175, %v1177
          %v1179 = vrot.slane %v1172, %v1178
          %v1181 = vsel %vm697, %v1008, 0
          %v1184 = vsel %vm1020, %v1179, 0
          %1186 = vmatprep.subr.bf16.mxu0 0
          %1187 = vmatpush1.bf16.msra.mxu0 %v1184
          %1188 = vmatprep.subr.bf16.mxu0 0
          %1189 = vmatpush1.bf16.msra.mxu0 0
          %1190 = vmatprep.subr.bf16.mxu0 0
          %1191 = vmatpush1.bf16.msra.mxu0 0
          %1192 = vmatprep.subr.bf16.mxu0 0
          %1193 = vmatpush1.bf16.msra.mxu0 0
          %1194 = vmatprep.subr.bf16.mxu0 0
          %1195 = vmatpush1.bf16.msra.mxu0 0
          %1196 = vmatprep.subr.bf16.mxu0 0
          %1197 = vmatpush1.bf16.msra.mxu0 0
          %1198 = vmatprep.subr.bf16.mxu0 0
          %1199 = vmatpush1.bf16.msra.mxu0 0
          %1200 = vmatprep.subr.bf16.mxu0 0
          %1201 = vmatpush1.bf16.msra.mxu0 0
          %1202 = vmatprep.subr.bf16.mxu0 0
          %1203 = vmatpush1.bf16.msra.mxu0 0
          %1204 = vmatprep.subr.bf16.mxu0 0
          %1205 = vmatpush1.bf16.msra.mxu0 0
          %1206 = vmatprep.subr.bf16.mxu0 0
          %1207 = vmatpush1.bf16.msra.mxu0 0
          %1208 = vmatprep.subr.bf16.mxu0 0
          %1209 = vmatpush1.bf16.msra.mxu0 0
          %1210 = vmatprep.subr.bf16.mxu0 0
          %1211 = vmatpush1.bf16.msra.mxu0 0
          %1212 = vmatprep.subr.bf16.mxu0 0
          %1213 = vmatpush1.bf16.msra.mxu0 0
          %1214 = vmatprep.subr.bf16.mxu0 0
          %1215 = vmatpush1.bf16.msra.mxu0 0
          %1216 = vmatprep.subr.bf16.mxu0 0
          %1217 = vmatpush1.bf16.msra.mxu0 0
          %1218 = vmatprep.mubr.bf16.mxu0 0
          %1219 = vmatmul.mubr.bf16.gmra.mrb[0].mxu0 %v1181
          %v1220 = vpop.f32.mrb[0].mxu0
          %v1221 = vadd.f32 0.0, %v1220
          %v1222 = vpop.f32.mrb[0].mxu0
          %v1223 = vpop.f32.mrb[0].mxu0
          %v1224 = vpop.f32.mrb[0].mxu0
          %1225 = vdwg.mxu0
          %v1226 = vadd.f32 %v1001, %v1059
          %v1227 = vadd.f32 %v1002, %v1113
          %v1228 = vadd.f32 %v1003, %v1167
          %v1229 = vadd.f32 %v1004, %v1221
        $region160: #{gpt_forward.8} parent=142 // loop_footer
          %s525 = sadd.s32 %s523, 1
        $region161: #{gpt_forward.8} parent=142 // loop_footer_branch
          %522 = sbr.rel target = $region157
        $region162: #{gpt_forward.8} parent=142 // loop_exit
          _
        %v1230 = vrcp.pop %v532
        %v1231 = vrcp.pop %v533
        %v1232 = vrcp.pop %v534
        %v1233 = vrcp.pop %v535
        %v1234 = vmul.f32 %v536, %v1230
        %v1235 = vmul.f32 %v537, %v1231
        %v1236 = vmul.f32 %v538, %v1232
        %v1237 = vmul.f32 %v539, %v1233
        %v1238 = vcombine.low %v1234, %v1236
        %v1239 = vcombine.high %v1234, %v1236
        %v1241 = vunpack.c.l.s4 1983009808
        %v1242 = vunpack.c.0.s8 %v1241
        %v1243 = vlaneseq
        %v1244 = vshrl.u32 %v1243, 7
        %v1245 = vsub.s32 %v1242, %v1244
        %v1246 = vrot.slane %v1238, %v1245
        %v1248 = vunpack.c.l.s4 1983009808
        %v1249 = vunpack.c.0.s8 %v1248
        %v1250 = vlaneseq
        %v1251 = vshrl.u32 %v1250, 7
        %v1252 = vsub.s32 %v1249, %v1251
        %v1253 = vrot.slane %v1239, %v1252
        %v1254 = vcombine.low %v1235, %v1237
        %v1255 = vcombine.high %v1235, %v1237
        %v1257 = vunpack.c.l.s4 1983009808
        %v1258 = vunpack.c.0.s8 %v1257
        %v1259 = vlaneseq
        %v1260 = vshrl.u32 %v1259, 7
        %v1261 = vsub.s32 %v1258, %v1260
        %v1262 = vrot.slane %v1254, %v1261
        %v1264 = vunpack.c.l.s4 1983009808
        %v1265 = vunpack.c.0.s8 %v1264
        %v1266 = vlaneseq
        %v1267 = vshrl.u32 %v1266, 7
        %v1268 = vsub.s32 %v1265, %v1267
        %v1269 = vrot.slane %v1255, %v1268
        %v1270 = vcombine.low %v1246, %v1262
        %v1271 = vcombine.high %v1246, %v1262
        %v1273 = vunpack.c.l.s4 1934713408
        %v1274 = vunpack.c.0.s8 %v1273
        %v1275 = vlaneseq
        %v1276 = vshrl.u32 %v1275, 7
        %v1277 = vsub.s32 %v1274, %v1276
        %v1278 = vrot.slane %v1270, %v1277
        %v1280 = vunpack.c.l.s4 1934713408
        %v1281 = vunpack.c.0.s8 %v1280
        %v1282 = vlaneseq
        %v1283 = vshrl.u32 %v1282, 7
        %v1284 = vsub.s32 %v1281, %v1283
        %v1285 = vrot.slane %v1271, %v1284
        %v1286 = vcombine.low %v1253, %v1269
        %v1287 = vcombine.high %v1253, %v1269
        %v1289 = vunpack.c.l.s4 1934713408
        %v1290 = vunpack.c.0.s8 %v1289
        %v1291 = vlaneseq
        %v1292 = vshrl.u32 %v1291, 7
        %v1293 = vsub.s32 %v1290, %v1292
        %v1294 = vrot.slane %v1286, %v1293
        %v1296 = vunpack.c.l.s4 1934713408
        %v1297 = vunpack.c.0.s8 %v1296
        %v1298 = vlaneseq
        %v1299 = vshrl.u32 %v1298, 7
        %v1300 = vsub.s32 %v1297, %v1299
        %v1301 = vrot.slane %v1287, %v1300
        %v1302 = vcombine.high %v1278, 0.0
        %v1303 = vcombine.high %v1285, 0.0
        %v1304 = vcombine.high %v1294, 0.0
        %v1305 = vcombine.high %v1301, 0.0
        %v1306 = vcombine.low %v1278, %v1285
        %v1308 = vunpack.c.l.s4 1983009808
        %v1309 = vunpack.c.0.s8 %v1308
        %v1310 = vlaneseq
        %v1311 = vshrl.u32 %v1310, 7
        %v1312 = vsub.s32 %v1309, %v1311
        %v1313 = vrot.slane %v1306, %v1312
        %v1314 = vcombine.low %v1302, %v1303
        %v1316 = vunpack.c.l.s4 1983009808
        %v1317 = vunpack.c.0.s8 %v1316
        %v1318 = vlaneseq
        %v1319 = vshrl.u32 %v1318, 7
        %v1320 = vsub.s32 %v1317, %v1319
        %v1321 = vrot.slane %v1314, %v1320
        %v1322 = vcombine.low %v1294, %v1301
        %v1324 = vunpack.c.l.s4 1983009808
        %v1325 = vunpack.c.0.s8 %v1324
        %v1326 = vlaneseq
        %v1327 = vshrl.u32 %v1326, 7
        %v1328 = vsub.s32 %v1325, %v1327
        %v1329 = vrot.slane %v1322, %v1328
        %v1330 = vcombine.low %v1304, %v1305
        %v1332 = vunpack.c.l.s4 1983009808
        %v1333 = vunpack.c.0.s8 %v1332
        %v1334 = vlaneseq
        %v1335 = vshrl.u32 %v1334, 7
        %v1336 = vsub.s32 %v1333, %v1335
        %v1337 = vrot.slane %v1330, %v1336
        %v1338 = vcombine.low %v1313, %v1321
        %v1339 = vcombine.high %v1313, %v1321
        %v1341 = vunpack.c.l.s4 1934713408
        %v1342 = vunpack.c.0.s8 %v1341
        %v1343 = vlaneseq
        %v1344 = vshrl.u32 %v1343, 7
        %v1345 = vsub.s32 %v1342, %v1344
        %v1346 = vrot.slane %v1338, %v1345
        %v1348 = vunpack.c.l.s4 1934713408
        %v1349 = vunpack.c.0.s8 %v1348
        %v1350 = vlaneseq
        %v1351 = vshrl.u32 %v1350, 7
        %v1352 = vsub.s32 %v1349, %v1351
        %v1353 = vrot.slane %v1339, %v1352
        %v1354 = vcombine.low %v1329, %v1337
        %v1355 = vcombine.high %v1329, %v1337
        %v1357 = vunpack.c.l.s4 1934713408
        %v1358 = vunpack.c.0.s8 %v1357
        %v1359 = vlaneseq
        %v1360 = vshrl.u32 %v1359, 7
        %v1361 = vsub.s32 %v1358, %v1360
        %v1362 = vrot.slane %v1354, %v1361
        %v1364 = vunpack.c.l.s4 1934713408
        %v1365 = vunpack.c.0.s8 %v1364
        %v1366 = vlaneseq
        %v1367 = vshrl.u32 %v1366, 7
        %v1368 = vsub.s32 %v1365, %v1367
        %v1369 = vrot.slane %v1355, %v1368
        %v1370 = vcombine.low %v1346, %v1362
        %v1371 = vcombine.high %v1346, %v1362
        %v1372 = vcombine.low %v1353, %v1369
        %v1373 = vcombine.high %v1353, %v1369
        %1375 = vrot.lane.b32.xlu0 %v1371, 8
        %v1376 = vpop.permute.xlu0 %1375
        %1379 = vrot.lane.b32.xlu0 %v1372, 16
        %v1380 = vpop.permute.xlu0 %1379
        %1383 = vrot.lane.b32.xlu0 %v1373, 24
        %v1384 = vpop.permute.xlu0 %1383
        %vm1386 = vcmask 64512
        %v1387 = vsel %vm1386, %v1370, %v1376
        %vm1388 = vcmask 130048
        %v1389 = vsel %vm1388, %v1387, %v1380
        %vm1390 = vcmask 195584
        %v1391 = vsel %vm1390, %v1389, %v1384
        %v1392 = vpack.c.bf16 %v1391, %v1391
        %vm1393 = vcmask 257024
        %1394 = vst.msk [vmem:[%s446] sm:$0xf] %vm1393, %v1392
        %p1395 = scmp.lt.s32.totalorder %s18, 1
        %s1396 = scalar_select %p1395, %s18, 1
        %p1397 = scmp.lt.s32.totalorder %s19, 0
        %s1398 = scalar_select %p1397, %s19, 0
        %s1399 = sadd.s32 %s1398, %s1396
        %s1400 = smul.addr %s1399, 4
        %s1401 = scalar_lea.vmem %s3, %s1400
        // Predicated region
        $region163: #{gpt_forward.8} parent=142 // pred_check
          %p1402 = pneg %p126
        $region164: #{gpt_forward.8} parent=142 // pred_check_branch
          %1404 = sbr.rel (%p1402) target = $region166
        $region165: #{gpt_forward.8} parent=142 // pred_region
          _
        $region166: #{gpt_forward.8} parent=142 // pred_fallthru
          _
      $region143: #{gpt_forward.8} parent=5 // pred_fallthru
        _
      %p1405 = scmp.le.s32.totalorder 2, %s9
      // Predicated region
      $region167: #{gpt_forward.8} parent=5 // pred_check
        %p1406 = pneg %p1405
      $region168: #{gpt_forward.8} parent=5 // pred_check_branch
        %1408 = sbr.rel (%p1406) target = $region170
      $region169: #{gpt_forward.8} parent=5 // pred_region
        %s1409 = ssub.s32 %s9, 2
        // Predicated region
        $region171: #{gpt_forward.8} parent=169 // pred_check
          %p1410 = pneg %p132
        $region172: #{gpt_forward.8} parent=169 // pred_check_branch
          %1412 = sbr.rel (%p1410) target = $region174
        $region173: #{gpt_forward.8} parent=169 // pred_region
          %p1413 = scmp.lt.s32.totalorder %s20, 1
          %s1414 = scalar_select %p1413, %s20, 1
          %p1415 = scmp.lt.s32.totalorder %s21, 0
          %s1416 = scalar_select %p1415, %s21, 0
          %s1417 = sadd.s32 %s1416, %s1414
          %s1418 = smul.addr %s1417, 4
          %s1419 = scalar_lea.vmem %s3, %s1418
        $region174: #{gpt_forward.8} parent=169 // pred_fallthru
          _
      $region170: #{gpt_forward.8} parent=5 // pred_fallthru
        _
    $region6: #{gpt_forward.8} parent=1 // loop_footer
      %s13 = sadd.s32 1, %s9
    $region7: #{gpt_forward.8} parent=1 // loop_footer_branch
      %8 = sbr.rel target = $region3
    $region8: #{gpt_forward.8} parent=1 // loop_exit
      _

</llo_original>
